<compile_context>
chip_gen: v6e
topology: v6e:2x2x1
jax: 0.10.0
libtpu: 0.0.40
codegen_flags: <defaults>
</compile_context>

<pallas_src>
import functools

import jax
import jax.numpy as jnp
import numpy as np
from jax import lax
from jax.experimental import pallas as pl
from jax.experimental.pallas import tpu as pltpu


_DIST_INF = 1e30   # sentinel for masked / knocked-out squared distances
_IDX_BIG = 1e30    # sentinel "no index" (larger than any valid f32 column id)


def _knn_xy_kernel(xy_t_ref, q_ref, dx_ref, dy_ref, *,
                   n_valid, n_cols_pad, block_m, block_c, k):
    """One row-block of queries, streaming over candidate chunks.

    xy_t_ref : (2, n_cols_pad) f32 -- row 0 = x, row 1 = y (lane-dense), resident
    q_ref    : (block_m, 2)    f32 -- query block, pipelined per grid step
    dx_ref   : (block_m, 128)  f32 -- lane j < k holds x_q - x_nbr_j
    dy_ref   : (block_m, 128)  f32 -- lane j < k holds y_q - y_nbr_j
    """
    n_chunks = n_cols_pad // block_c
    row_start = pl.program_id(0) * block_m

    q = q_ref[...]                                   # (block_m, 2)
    x_q = q[:, 0:1]                                  # (block_m, 1)
    y_q = q[:, 1:2]

    # f32 ids (exact for < 2^24): keeps both reductions on one f32 datapath.
    row_ids = (lax.broadcasted_iota(jnp.int32, (block_m, 1), 0)
               + row_start).astype(jnp.float32)                       # (bm, 1)
    col_loc = lax.broadcasted_iota(jnp.int32, (1, block_c), 1).astype(jnp.float32)
    lane_k = lax.broadcasted_iota(jnp.int32, (1, 128), 1)             # rebuild mask

    # Running best-k: queries on sublanes, k on lanes (padded to one lane tile).
    best0 = (jnp.full((block_m, 128), _DIST_INF, jnp.float32),   # distance
             jnp.full((block_m, 128), _IDX_BIG, jnp.float32),    # global column id
             jnp.zeros((block_m, 128), jnp.float32),             # x_q - x_nbr
             jnp.zeros((block_m, 128), jnp.float32))             # y_q - y_nbr

    def chunk_body(c, carry):
        best_d, best_i, best_dx, best_dy = carry
        col_off = pl.multiple_of(c * block_c, block_c)
        xy_c = xy_t_ref[:, pl.ds(col_off, block_c)]              # (2, block_c)
        x_c = xy_c[0:1, :]                                       # (1, block_c)
        y_c = xy_c[1:2, :]

        dx = x_q - x_c                                           # (bm, block_c)
        dy = y_q - y_c
        d = dx * dx + dy * dy
        col_g = col_loc + (c * block_c).astype(jnp.float32)      # (1, block_c)
        invalid = col_g == row_ids                               # exclude self
        if n_valid < n_cols_pad:
            invalid = invalid | (col_g >= float(n_valid))        # padded candidates
        d = jnp.where(invalid, _DIST_INF, d)

        new_d = jnp.full((block_m, 128), _DIST_INF, jnp.float32)
        new_i = jnp.full((block_m, 128), _IDX_BIG, jnp.float32)
        new_dx = jnp.zeros((block_m, 128), jnp.float32)
        new_dy = jnp.zeros((block_m, 128), jnp.float32)

        # k extraction rounds over (chunk U previous best): the survivors are
        # exactly the k nearest of all candidates seen so far (streaming top-k).
        for j in range(k):                                       # static unroll
            m = jnp.minimum(jnp.min(d, axis=1, keepdims=True),
                            jnp.min(best_d, axis=1, keepdims=True))   # (bm, 1)
            hit_c = d <= m
            hit_b = best_d <= m
            # first-occurrence tie break: smallest global column id among hits
            idx = jnp.minimum(
                jnp.min(jnp.where(hit_c, col_g, _IDX_BIG), axis=1, keepdims=True),
                jnp.min(jnp.where(hit_b, best_i, _IDX_BIG), axis=1, keepdims=True))
            sel_c = hit_c & (col_g == idx)
            sel_b = hit_b & (best_i == idx)
            # gather the selected entry's xy-offset with masked lane reductions
            dxj = (jnp.sum(jnp.where(sel_c, dx, 0.0), axis=1, keepdims=True)
                   + jnp.sum(jnp.where(sel_b, best_dx, 0.0), axis=1, keepdims=True))
            dyj = (jnp.sum(jnp.where(sel_c, dy, 0.0), axis=1, keepdims=True)
                   + jnp.sum(jnp.where(sel_b, best_dy, 0.0), axis=1, keepdims=True))
            # knock the selected entry out for the next round
            d = jnp.where(sel_c, _DIST_INF, d)
            best_d = jnp.where(sel_b, _DIST_INF, best_d)
            # write the round-j result into lane j of the new best arrays
            at_j = lane_k == j
            new_d = jnp.where(at_j, m, new_d)
            new_i = jnp.where(at_j, idx, new_i)
            new_dx = jnp.where(at_j, dxj, new_dx)
            new_dy = jnp.where(at_j, dyj, new_dy)

        return new_d, new_i, new_dx, new_dy

    _, _, best_dx, best_dy = lax.fori_loop(0, n_chunks, chunk_body, best0)

    # Full 128-lane unmasked stores; wrapper slices lanes [:k].
    dx_ref[...] = best_dx
    dy_ref[...] = best_dy


def _round_up(x, m):
    return ((x + m - 1) // m) * m


def get_knearest_neighbors_xy(p, num_neighbors, *, block_m=128, block_c=2048):
    """JAX/Pallas equivalent of get_knearest_neighbors_torch_xy.forward."""
    n = int(p.shape[0])
    k = int(num_neighbors)
    if not 1 <= k <= 128:
        raise NotImplementedError("num_neighbors must be in [1, 128]")
    xy = p[:, :2].astype(jnp.float32)                            # (N, 2)

    # --- row (query) tiling: >= 2 blocks when possible so both v7x
    #     TensorCores get work under dimension_semantics=("parallel",).
    block_m = max(8, (min(block_m, 128) // 8) * 8)
    if _round_up(n, block_m) // block_m < 2 and n > 8:
        block_m = max(8, _round_up((n + 1) // 2, 8))
    n_rows_pad = _round_up(n, block_m)

    # --- candidate (lane) tiling: chunking caps live VMEM at
    #     O(block_m * block_c) instead of O(block_m * N).
    block_c = max(128, (min(block_c, 4096) // 128) * 128)
    n_cols_pad = _round_up(n, 128)
    if n_cols_pad <= block_c:
        block_c = n_cols_pad
    else:
        n_cols_pad = _round_up(n_cols_pad, block_c)

    # Padded copies (padded rows are sliced off; padded columns are masked).
    xy_rows = (jnp.zeros((n_rows_pad, 2), jnp.float32).at[:n].set(xy)
               if n_rows_pad != n else xy)
    xy_cols = (jnp.zeros((n_cols_pad, 2), jnp.float32).at[:n].set(xy)
               if n_cols_pad != n else xy)
    xy_t = xy_cols.T                                             # (2, n_cols_pad)

    grid = (n_rows_pad // block_m,)
    kern = functools.partial(_knn_xy_kernel, n_valid=n, n_cols_pad=n_cols_pad,
                             block_m=block_m, block_c=block_c, k=k)

    # Advisory cost: VPU/XLU element work and the DMA actually issued.
    cost = pl.CostEstimate(
        flops=n_rows_pad * n_cols_pad * (5 + 12 * k),
        transcendentals=0,
        bytes_accessed=(2 * n_cols_pad * 4            # resident candidate coords
                        + n_rows_pad * 2 * 4          # query blocks
                        + 2 * n_rows_pad * 128 * 4))  # dx/dy output planes

    # VMEM budget: resident xy_t (2->8 sublane pad, double buffered) + wide
    # per-chunk intermediates + best-k carries + pipelined query/output blocks.
    vmem_est = (2 * 8 * n_cols_pad * 4
                + 8 * block_m * block_c * 4
                + 10 * block_m * 128 * 4
                + 2 * block_m * 128 * 4)
    vmem_limit = int(min(max(2 * vmem_est, 32 * 1024 * 1024), 64 * 1024 * 1024))

    dx, dy = pl.pallas_call(
        kern,
        out_shape=(jax.ShapeDtypeStruct((n_rows_pad, 128), jnp.float32),
                   jax.ShapeDtypeStruct((n_rows_pad, 128), jnp.float32)),
        grid=grid,
        in_specs=[
            # Candidate coords: grid-invariant, stays resident in VMEM.
            pl.BlockSpec((2, n_cols_pad), lambda i: (0, 0)),
            # Query coords: only the current (block_m, 2) slab is DMA'd.
            pl.BlockSpec((block_m, 2), lambda i: (i, 0)),
        ],
        out_specs=[pl.BlockSpec((block_m, 128), lambda i: (i, 0)),
                   pl.BlockSpec((block_m, 128), lambda i: (i, 0))],
        compiler_params=pltpu.CompilerParams(
            dimension_semantics=("parallel",),
            vmem_limit_bytes=vmem_limit,
        ),
        cost_estimate=cost,
    )(xy_t, xy_rows)

    # dx/dy planes -> (N, k, 2) with [..., 0] = dx_j, [..., 1] = dy_j.
    return jnp.stack([dx[:n, :k], dy[:n, :k]], axis=-1)


def _reference(p, num_neighbors):
    """Pure-JAX brute-force reference (mirrors sklearn k-NN + the torch loop)."""
    xy = p[:, :2].astype(jnp.float32)
    d2 = jnp.sum((xy[:, None, :] - xy[None, :, :]) ** 2, axis=-1)
    order = jnp.argsort(d2, axis=1)                  # self is first (dist 0)
    idx = order[:, 1:num_neighbors + 1]
    return xy[:, None, :] - xy[idx]                  # (N, k, 2)


if __name__ == "__main__":
    N, D, K = 128, 3, 4                              # points, coord dims, k
    key = jax.random.PRNGKey(0)
    p = jax.random.uniform(key, (N, D), dtype=jnp.float32)

    out = jax.block_until_ready(get_knearest_neighbors_xy(p, K))

    ref = _reference(p, K)
    assert out.shape == (N, K, 2), out.shape
    np.testing.assert_allclose(np.asarray(out), np.asarray(ref),
                               rtol=1e-5, atol=1e-5)
    print("KERNEL_OK")
</pallas_src>

<mosaic_0001>
module attributes {stable_mosaic.version = 11 : i64} {
  func.func @_knn_xy_kernel(%arg0: i32, %arg1: memref<2x128xf32, #tpu.memory_space<vmem>>, %arg2: memref<64x2xf32, #tpu.memory_space<vmem>>, %arg3: memref<64x128xf32, #tpu.memory_space<vmem>>, %arg4: memref<64x128xf32, #tpu.memory_space<vmem>>) attributes {dimension_semantics = [#tpu.dimension_semantics<parallel>], iteration_bounds = array<i64: 2>, scalar_prefetch = 0 : i64, scratch_operands = 0 : i64, tpu.core_type = #tpu.core_type<tc>, window_params = [{pipeline_mode = #tpu.pipeline_mode<synchronous>, transform_indices = @transform_0, window_bounds = array<i64: 2, 128>}, {transform_indices = @transform_1, window_bounds = array<i64: 64, 2>}, {transform_indices = @transform_2, window_bounds = array<i64: 64, 128>}, {transform_indices = @transform_3, window_bounds = array<i64: 64, 128>}]} {
    %c64_i32 = arith.constant 64 : i32
    %0 = arith.muli %arg0, %c64_i32 : i32
    %c0 = arith.constant 0 : index
    %c0_0 = arith.constant 0 : index
    %1 = vector.load %arg2[%c0, %c0_0] : memref<64x2xf32, #tpu.memory_space<vmem>>, vector<64x2xf32>
    %2 = vector.extract_strided_slice %1 {offsets = [0, 0], sizes = [64, 1], strides = [1, 1]} : vector<64x2xf32> to vector<64x1xf32>
    %3 = vector.extract_strided_slice %1 {offsets = [0, 1], sizes = [64, 1], strides = [1, 1]} : vector<64x2xf32> to vector<64x1xf32>
    %4 = tpu.iota {dimensions = array<i32: 0>} : vector<64x1xi32>
    %5 = vector.broadcast %0 : i32 to vector<64x1xi32>
    %6 = arith.addi %4, %5 : vector<64x1xi32>
    %7 = arith.sitofp %6 : vector<64x1xi32> to vector<64x1xf32>
    %8 = tpu.iota {dimensions = array<i32: 1>} : vector<1x128xi32>
    %9 = arith.sitofp %8 : vector<1x128xi32> to vector<1x128xf32>
    %10 = tpu.iota {dimensions = array<i32: 1>} : vector<1x128xi32>
    %cst = arith.constant 1.000000e+30 : f32
    %11 = vector.broadcast %cst : f32 to vector<64x128xf32>
    %cst_1 = arith.constant 1.000000e+30 : f32
    %12 = vector.broadcast %cst_1 : f32 to vector<64x128xf32>
    %cst_2 = arith.constant 0.000000e+00 : f32
    %13 = vector.broadcast %cst_2 : f32 to vector<64x128xf32>
    %cst_3 = arith.constant 0.000000e+00 : f32
    %14 = vector.broadcast %cst_3 : f32 to vector<64x128xf32>
    %c0_i32 = arith.constant 0 : i32
    %c128_i32 = arith.constant 128 : i32
    %15 = arith.muli %c0_i32, %c128_i32 : i32
    %16 = tpu.assume_multiple %15, 128 : i32
    %c0_4 = arith.constant 0 : index
    %17 = arith.index_cast %16 : i32 to index
    %18 = vector.load %arg1[%c0_4, %17] : memref<2x128xf32, #tpu.memory_space<vmem>>, vector<2x128xf32>
    %19 = vector.extract_strided_slice %18 {offsets = [0, 0], sizes = [1, 128], strides = [1, 1]} : vector<2x128xf32> to vector<1x128xf32>
    %20 = vector.extract_strided_slice %18 {offsets = [1, 0], sizes = [1, 128], strides = [1, 1]} : vector<2x128xf32> to vector<1x128xf32>
    %21 = vector.broadcast %2 : vector<64x1xf32> to vector<64x128xf32>
    %22 = vector.broadcast %19 : vector<1x128xf32> to vector<64x128xf32>
    %23 = arith.subf %21, %22 : vector<64x128xf32>
    %24 = vector.broadcast %3 : vector<64x1xf32> to vector<64x128xf32>
    %25 = vector.broadcast %20 : vector<1x128xf32> to vector<64x128xf32>
    %26 = arith.subf %24, %25 : vector<64x128xf32>
    %27 = arith.mulf %23, %23 : vector<64x128xf32>
    %28 = arith.mulf %26, %26 : vector<64x128xf32>
    %29 = arith.addf %27, %28 : vector<64x128xf32>
    %c128_i32_5 = arith.constant 128 : i32
    %30 = arith.muli %c0_i32, %c128_i32_5 : i32
    %31 = arith.sitofp %30 : i32 to f32
    %32 = vector.broadcast %31 : f32 to vector<1x128xf32>
    %33 = arith.addf %9, %32 : vector<1x128xf32>
    %34 = vector.broadcast %33 : vector<1x128xf32> to vector<64x128xf32>
    %35 = vector.broadcast %7 : vector<64x1xf32> to vector<64x128xf32>
    %36 = arith.cmpf oeq, %34, %35 : vector<64x128xf32>
    %cst_6 = arith.constant 1.000000e+30 : f32
    %37 = vector.broadcast %cst_6 : f32 to vector<64x128xf32>
    %38 = arith.select %36, %37, %29 : vector<64x128xi1>, vector<64x128xf32>
    %cst_7 = arith.constant 1.000000e+30 : f32
    %39 = vector.broadcast %cst_7 : f32 to vector<64x128xf32>
    %cst_8 = arith.constant 1.000000e+30 : f32
    %40 = vector.broadcast %cst_8 : f32 to vector<64x128xf32>
    %cst_9 = arith.constant 0.000000e+00 : f32
    %41 = vector.broadcast %cst_9 : f32 to vector<64x128xf32>
    %cst_10 = arith.constant 0.000000e+00 : f32
    %42 = vector.broadcast %cst_10 : f32 to vector<64x128xf32>
    %cst_11 = arith.constant dense<0x7F800000> : vector<64xf32>
    %43 = vector.multi_reduction <minimumf>, %38, %cst_11 [1] : vector<64x128xf32> to vector<64xf32>
    %44 = vector.shape_cast %43 : vector<64xf32> to vector<64x1xf32>
    %cst_12 = arith.constant dense<0x7F800000> : vector<64xf32>
    %45 = vector.multi_reduction <minimumf>, %11, %cst_12 [1] : vector<64x128xf32> to vector<64xf32>
    %46 = vector.shape_cast %45 : vector<64xf32> to vector<64x1xf32>
    %47 = arith.minimumf %44, %46 : vector<64x1xf32>
    %48 = vector.broadcast %47 : vector<64x1xf32> to vector<64x128xf32>
    %49 = arith.cmpf ole, %38, %48 : vector<64x128xf32>
    %50 = vector.broadcast %47 : vector<64x1xf32> to vector<64x128xf32>
    %51 = arith.cmpf ole, %11, %50 : vector<64x128xf32>
    %cst_13 = arith.constant 1.000000e+30 : f32
    %52 = vector.shape_cast %33 : vector<1x128xf32> to vector<1x128xf32>
    %53 = vector.broadcast %52 : vector<1x128xf32> to vector<64x128xf32>
    %54 = vector.broadcast %cst_13 : f32 to vector<64x128xf32>
    %55 = arith.select %49, %53, %54 : vector<64x128xi1>, vector<64x128xf32>
    %cst_14 = arith.constant dense<0x7F800000> : vector<64xf32>
    %56 = vector.multi_reduction <minimumf>, %55, %cst_14 [1] : vector<64x128xf32> to vector<64xf32>
    %57 = vector.shape_cast %56 : vector<64xf32> to vector<64x1xf32>
    %cst_15 = arith.constant 1.000000e+30 : f32
    %58 = vector.broadcast %cst_15 : f32 to vector<64x128xf32>
    %59 = arith.select %51, %12, %58 : vector<64x128xi1>, vector<64x128xf32>
    %cst_16 = arith.constant dense<0x7F800000> : vector<64xf32>
    %60 = vector.multi_reduction <minimumf>, %59, %cst_16 [1] : vector<64x128xf32> to vector<64xf32>
    %61 = vector.shape_cast %60 : vector<64xf32> to vector<64x1xf32>
    %62 = arith.minimumf %57, %61 : vector<64x1xf32>
    %63 = vector.broadcast %33 : vector<1x128xf32> to vector<64x128xf32>
    %64 = vector.broadcast %62 : vector<64x1xf32> to vector<64x128xf32>
    %65 = arith.cmpf oeq, %63, %64 : vector<64x128xf32>
    %66 = arith.andi %49, %65 : vector<64x128xi1>
    %67 = vector.broadcast %62 : vector<64x1xf32> to vector<64x128xf32>
    %68 = arith.cmpf oeq, %12, %67 : vector<64x128xf32>
    %69 = arith.andi %51, %68 : vector<64x128xi1>
    %cst_17 = arith.constant 0.000000e+00 : f32
    %70 = vector.broadcast %cst_17 : f32 to vector<64x128xf32>
    %71 = arith.select %66, %23, %70 : vector<64x128xi1>, vector<64x128xf32>
    %cst_18 = arith.constant dense<0.000000e+00> : vector<64xf32>
    %72 = vector.multi_reduction <add>, %71, %cst_18 [1] : vector<64x128xf32> to vector<64xf32>
    %73 = vector.shape_cast %72 : vector<64xf32> to vector<64x1xf32>
    %cst_19 = arith.constant 0.000000e+00 : f32
    %74 = vector.broadcast %cst_19 : f32 to vector<64x128xf32>
    %75 = arith.select %69, %13, %74 : vector<64x128xi1>, vector<64x128xf32>
    %cst_20 = arith.constant dense<0.000000e+00> : vector<64xf32>
    %76 = vector.multi_reduction <add>, %75, %cst_20 [1] : vector<64x128xf32> to vector<64xf32>
    %77 = vector.shape_cast %76 : vector<64xf32> to vector<64x1xf32>
    %78 = arith.addf %73, %77 : vector<64x1xf32>
    %cst_21 = arith.constant 0.000000e+00 : f32
    %79 = vector.broadcast %cst_21 : f32 to vector<64x128xf32>
    %80 = arith.select %66, %26, %79 : vector<64x128xi1>, vector<64x128xf32>
    %cst_22 = arith.constant dense<0.000000e+00> : vector<64xf32>
    %81 = vector.multi_reduction <add>, %80, %cst_22 [1] : vector<64x128xf32> to vector<64xf32>
    %82 = vector.shape_cast %81 : vector<64xf32> to vector<64x1xf32>
    %cst_23 = arith.constant 0.000000e+00 : f32
    %83 = vector.broadcast %cst_23 : f32 to vector<64x128xf32>
    %84 = arith.select %69, %14, %83 : vector<64x128xi1>, vector<64x128xf32>
    %cst_24 = arith.constant dense<0.000000e+00> : vector<64xf32>
    %85 = vector.multi_reduction <add>, %84, %cst_24 [1] : vector<64x128xf32> to vector<64xf32>
    %86 = vector.shape_cast %85 : vector<64xf32> to vector<64x1xf32>
    %87 = arith.addf %82, %86 : vector<64x1xf32>
    %cst_25 = arith.constant 1.000000e+30 : f32
    %88 = vector.broadcast %cst_25 : f32 to vector<64x128xf32>
    %89 = arith.select %66, %88, %38 : vector<64x128xi1>, vector<64x128xf32>
    %cst_26 = arith.constant 1.000000e+30 : f32
    %90 = vector.broadcast %cst_26 : f32 to vector<64x128xf32>
    %91 = arith.select %69, %90, %11 : vector<64x128xi1>, vector<64x128xf32>
    %c0_i32_27 = arith.constant 0 : i32
    %92 = vector.broadcast %c0_i32_27 : i32 to vector<1x128xi32>
    %93 = arith.cmpi eq, %10, %92 : vector<1x128xi32>
    %94 = vector.shape_cast %93 : vector<1x128xi1> to vector<1x128xi1>
    %95 = vector.broadcast %94 : vector<1x128xi1> to vector<64x128xi1>
    %96 = vector.shape_cast %47 : vector<64x1xf32> to vector<64x1xf32>
    %97 = vector.broadcast %96 : vector<64x1xf32> to vector<64x128xf32>
    %98 = arith.select %95, %97, %39 : vector<64x128xi1>, vector<64x128xf32>
    %99 = vector.shape_cast %93 : vector<1x128xi1> to vector<1x128xi1>
    %100 = vector.broadcast %99 : vector<1x128xi1> to vector<64x128xi1>
    %101 = vector.shape_cast %62 : vector<64x1xf32> to vector<64x1xf32>
    %102 = vector.broadcast %101 : vector<64x1xf32> to vector<64x128xf32>
    %103 = arith.select %100, %102, %40 : vector<64x128xi1>, vector<64x128xf32>
    %104 = vector.shape_cast %93 : vector<1x128xi1> to vector<1x128xi1>
    %105 = vector.broadcast %104 : vector<1x128xi1> to vector<64x128xi1>
    %106 = vector.shape_cast %78 : vector<64x1xf32> to vector<64x1xf32>
    %107 = vector.broadcast %106 : vector<64x1xf32> to vector<64x128xf32>
    %108 = arith.select %105, %107, %41 : vector<64x128xi1>, vector<64x128xf32>
    %109 = vector.shape_cast %93 : vector<1x128xi1> to vector<1x128xi1>
    %110 = vector.broadcast %109 : vector<1x128xi1> to vector<64x128xi1>
    %111 = vector.shape_cast %87 : vector<64x1xf32> to vector<64x1xf32>
    %112 = vector.broadcast %111 : vector<64x1xf32> to vector<64x128xf32>
    %113 = arith.select %110, %112, %42 : vector<64x128xi1>, vector<64x128xf32>
    %cst_28 = arith.constant dense<0x7F800000> : vector<64xf32>
    %114 = vector.multi_reduction <minimumf>, %89, %cst_28 [1] : vector<64x128xf32> to vector<64xf32>
    %115 = vector.shape_cast %114 : vector<64xf32> to vector<64x1xf32>
    %cst_29 = arith.constant dense<0x7F800000> : vector<64xf32>
    %116 = vector.multi_reduction <minimumf>, %91, %cst_29 [1] : vector<64x128xf32> to vector<64xf32>
    %117 = vector.shape_cast %116 : vector<64xf32> to vector<64x1xf32>
    %118 = arith.minimumf %115, %117 : vector<64x1xf32>
    %119 = vector.broadcast %118 : vector<64x1xf32> to vector<64x128xf32>
    %120 = arith.cmpf ole, %89, %119 : vector<64x128xf32>
    %121 = vector.broadcast %118 : vector<64x1xf32> to vector<64x128xf32>
    %122 = arith.cmpf ole, %91, %121 : vector<64x128xf32>
    %cst_30 = arith.constant 1.000000e+30 : f32
    %123 = vector.shape_cast %33 : vector<1x128xf32> to vector<1x128xf32>
    %124 = vector.broadcast %123 : vector<1x128xf32> to vector<64x128xf32>
    %125 = vector.broadcast %cst_30 : f32 to vector<64x128xf32>
    %126 = arith.select %120, %124, %125 : vector<64x128xi1>, vector<64x128xf32>
    %cst_31 = arith.constant dense<0x7F800000> : vector<64xf32>
    %127 = vector.multi_reduction <minimumf>, %126, %cst_31 [1] : vector<64x128xf32> to vector<64xf32>
    %128 = vector.shape_cast %127 : vector<64xf32> to vector<64x1xf32>
    %cst_32 = arith.constant 1.000000e+30 : f32
    %129 = vector.broadcast %cst_32 : f32 to vector<64x128xf32>
    %130 = arith.select %122, %12, %129 : vector<64x128xi1>, vector<64x128xf32>
    %cst_33 = arith.constant dense<0x7F800000> : vector<64xf32>
    %131 = vector.multi_reduction <minimumf>, %130, %cst_33 [1] : vector<64x128xf32> to vector<64xf32>
    %132 = vector.shape_cast %131 : vector<64xf32> to vector<64x1xf32>
    %133 = arith.minimumf %128, %132 : vector<64x1xf32>
    %134 = vector.broadcast %33 : vector<1x128xf32> to vector<64x128xf32>
    %135 = vector.broadcast %133 : vector<64x1xf32> to vector<64x128xf32>
    %136 = arith.cmpf oeq, %134, %135 : vector<64x128xf32>
    %137 = arith.andi %120, %136 : vector<64x128xi1>
    %138 = vector.broadcast %133 : vector<64x1xf32> to vector<64x128xf32>
    %139 = arith.cmpf oeq, %12, %138 : vector<64x128xf32>
    %140 = arith.andi %122, %139 : vector<64x128xi1>
    %cst_34 = arith.constant 0.000000e+00 : f32
    %141 = vector.broadcast %cst_34 : f32 to vector<64x128xf32>
    %142 = arith.select %137, %23, %141 : vector<64x128xi1>, vector<64x128xf32>
    %cst_35 = arith.constant dense<0.000000e+00> : vector<64xf32>
    %143 = vector.multi_reduction <add>, %142, %cst_35 [1] : vector<64x128xf32> to vector<64xf32>
    %144 = vector.shape_cast %143 : vector<64xf32> to vector<64x1xf32>
    %cst_36 = arith.constant 0.000000e+00 : f32
    %145 = vector.broadcast %cst_36 : f32 to vector<64x128xf32>
    %146 = arith.select %140, %13, %145 : vector<64x128xi1>, vector<64x128xf32>
    %cst_37 = arith.constant dense<0.000000e+00> : vector<64xf32>
    %147 = vector.multi_reduction <add>, %146, %cst_37 [1] : vector<64x128xf32> to vector<64xf32>
    %148 = vector.shape_cast %147 : vector<64xf32> to vector<64x1xf32>
    %149 = arith.addf %144, %148 : vector<64x1xf32>
    %cst_38 = arith.constant 0.000000e+00 : f32
    %150 = vector.broadcast %cst_38 : f32 to vector<64x128xf32>
    %151 = arith.select %137, %26, %150 : vector<64x128xi1>, vector<64x128xf32>
    %cst_39 = arith.constant dense<0.000000e+00> : vector<64xf32>
    %152 = vector.multi_reduction <add>, %151, %cst_39 [1] : vector<64x128xf32> to vector<64xf32>
    %153 = vector.shape_cast %152 : vector<64xf32> to vector<64x1xf32>
    %cst_40 = arith.constant 0.000000e+00 : f32
    %154 = vector.broadcast %cst_40 : f32 to vector<64x128xf32>
    %155 = arith.select %140, %14, %154 : vector<64x128xi1>, vector<64x128xf32>
    %cst_41 = arith.constant dense<0.000000e+00> : vector<64xf32>
    %156 = vector.multi_reduction <add>, %155, %cst_41 [1] : vector<64x128xf32> to vector<64xf32>
    %157 = vector.shape_cast %156 : vector<64xf32> to vector<64x1xf32>
    %158 = arith.addf %153, %157 : vector<64x1xf32>
    %cst_42 = arith.constant 1.000000e+30 : f32
    %159 = vector.broadcast %cst_42 : f32 to vector<64x128xf32>
    %160 = arith.select %137, %159, %89 : vector<64x128xi1>, vector<64x128xf32>
    %cst_43 = arith.constant 1.000000e+30 : f32
    %161 = vector.broadcast %cst_43 : f32 to vector<64x128xf32>
    %162 = arith.select %140, %161, %91 : vector<64x128xi1>, vector<64x128xf32>
    %c1_i32 = arith.constant 1 : i32
    %163 = vector.broadcast %c1_i32 : i32 to vector<1x128xi32>
    %164 = arith.cmpi eq, %10, %163 : vector<1x128xi32>
    %165 = vector.shape_cast %164 : vector<1x128xi1> to vector<1x128xi1>
    %166 = vector.broadcast %165 : vector<1x128xi1> to vector<64x128xi1>
    %167 = vector.shape_cast %118 : vector<64x1xf32> to vector<64x1xf32>
    %168 = vector.broadcast %167 : vector<64x1xf32> to vector<64x128xf32>
    %169 = arith.select %166, %168, %98 : vector<64x128xi1>, vector<64x128xf32>
    %170 = vector.shape_cast %164 : vector<1x128xi1> to vector<1x128xi1>
    %171 = vector.broadcast %170 : vector<1x128xi1> to vector<64x128xi1>
    %172 = vector.shape_cast %133 : vector<64x1xf32> to vector<64x1xf32>
    %173 = vector.broadcast %172 : vector<64x1xf32> to vector<64x128xf32>
    %174 = arith.select %171, %173, %103 : vector<64x128xi1>, vector<64x128xf32>
    %175 = vector.shape_cast %164 : vector<1x128xi1> to vector<1x128xi1>
    %176 = vector.broadcast %175 : vector<1x128xi1> to vector<64x128xi1>
    %177 = vector.shape_cast %149 : vector<64x1xf32> to vector<64x1xf32>
    %178 = vector.broadcast %177 : vector<64x1xf32> to vector<64x128xf32>
    %179 = arith.select %176, %178, %108 : vector<64x128xi1>, vector<64x128xf32>
    %180 = vector.shape_cast %164 : vector<1x128xi1> to vector<1x128xi1>
    %181 = vector.broadcast %180 : vector<1x128xi1> to vector<64x128xi1>
    %182 = vector.shape_cast %158 : vector<64x1xf32> to vector<64x1xf32>
    %183 = vector.broadcast %182 : vector<64x1xf32> to vector<64x128xf32>
    %184 = arith.select %181, %183, %113 : vector<64x128xi1>, vector<64x128xf32>
    %cst_44 = arith.constant dense<0x7F800000> : vector<64xf32>
    %185 = vector.multi_reduction <minimumf>, %160, %cst_44 [1] : vector<64x128xf32> to vector<64xf32>
    %186 = vector.shape_cast %185 : vector<64xf32> to vector<64x1xf32>
    %cst_45 = arith.constant dense<0x7F800000> : vector<64xf32>
    %187 = vector.multi_reduction <minimumf>, %162, %cst_45 [1] : vector<64x128xf32> to vector<64xf32>
    %188 = vector.shape_cast %187 : vector<64xf32> to vector<64x1xf32>
    %189 = arith.minimumf %186, %188 : vector<64x1xf32>
    %190 = vector.broadcast %189 : vector<64x1xf32> to vector<64x128xf32>
    %191 = arith.cmpf ole, %160, %190 : vector<64x128xf32>
    %192 = vector.broadcast %189 : vector<64x1xf32> to vector<64x128xf32>
    %193 = arith.cmpf ole, %162, %192 : vector<64x128xf32>
    %cst_46 = arith.constant 1.000000e+30 : f32
    %194 = vector.shape_cast %33 : vector<1x128xf32> to vector<1x128xf32>
    %195 = vector.broadcast %194 : vector<1x128xf32> to vector<64x128xf32>
    %196 = vector.broadcast %cst_46 : f32 to vector<64x128xf32>
    %197 = arith.select %191, %195, %196 : vector<64x128xi1>, vector<64x128xf32>
    %cst_47 = arith.constant dense<0x7F800000> : vector<64xf32>
    %198 = vector.multi_reduction <minimumf>, %197, %cst_47 [1] : vector<64x128xf32> to vector<64xf32>
    %199 = vector.shape_cast %198 : vector<64xf32> to vector<64x1xf32>
    %cst_48 = arith.constant 1.000000e+30 : f32
    %200 = vector.broadcast %cst_48 : f32 to vector<64x128xf32>
    %201 = arith.select %193, %12, %200 : vector<64x128xi1>, vector<64x128xf32>
    %cst_49 = arith.constant dense<0x7F800000> : vector<64xf32>
    %202 = vector.multi_reduction <minimumf>, %201, %cst_49 [1] : vector<64x128xf32> to vector<64xf32>
    %203 = vector.shape_cast %202 : vector<64xf32> to vector<64x1xf32>
    %204 = arith.minimumf %199, %203 : vector<64x1xf32>
    %205 = vector.broadcast %33 : vector<1x128xf32> to vector<64x128xf32>
    %206 = vector.broadcast %204 : vector<64x1xf32> to vector<64x128xf32>
    %207 = arith.cmpf oeq, %205, %206 : vector<64x128xf32>
    %208 = arith.andi %191, %207 : vector<64x128xi1>
    %209 = vector.broadcast %204 : vector<64x1xf32> to vector<64x128xf32>
    %210 = arith.cmpf oeq, %12, %209 : vector<64x128xf32>
    %211 = arith.andi %193, %210 : vector<64x128xi1>
    %cst_50 = arith.constant 0.000000e+00 : f32
    %212 = vector.broadcast %cst_50 : f32 to vector<64x128xf32>
    %213 = arith.select %208, %23, %212 : vector<64x128xi1>, vector<64x128xf32>
    %cst_51 = arith.constant dense<0.000000e+00> : vector<64xf32>
    %214 = vector.multi_reduction <add>, %213, %cst_51 [1] : vector<64x128xf32> to vector<64xf32>
    %215 = vector.shape_cast %214 : vector<64xf32> to vector<64x1xf32>
    %cst_52 = arith.constant 0.000000e+00 : f32
    %216 = vector.broadcast %cst_52 : f32 to vector<64x128xf32>
    %217 = arith.select %211, %13, %216 : vector<64x128xi1>, vector<64x128xf32>
    %cst_53 = arith.constant dense<0.000000e+00> : vector<64xf32>
    %218 = vector.multi_reduction <add>, %217, %cst_53 [1] : vector<64x128xf32> to vector<64xf32>
    %219 = vector.shape_cast %218 : vector<64xf32> to vector<64x1xf32>
    %220 = arith.addf %215, %219 : vector<64x1xf32>
    %cst_54 = arith.constant 0.000000e+00 : f32
    %221 = vector.broadcast %cst_54 : f32 to vector<64x128xf32>
    %222 = arith.select %208, %26, %221 : vector<64x128xi1>, vector<64x128xf32>
    %cst_55 = arith.constant dense<0.000000e+00> : vector<64xf32>
    %223 = vector.multi_reduction <add>, %222, %cst_55 [1] : vector<64x128xf32> to vector<64xf32>
    %224 = vector.shape_cast %223 : vector<64xf32> to vector<64x1xf32>
    %cst_56 = arith.constant 0.000000e+00 : f32
    %225 = vector.broadcast %cst_56 : f32 to vector<64x128xf32>
    %226 = arith.select %211, %14, %225 : vector<64x128xi1>, vector<64x128xf32>
    %cst_57 = arith.constant dense<0.000000e+00> : vector<64xf32>
    %227 = vector.multi_reduction <add>, %226, %cst_57 [1] : vector<64x128xf32> to vector<64xf32>
    %228 = vector.shape_cast %227 : vector<64xf32> to vector<64x1xf32>
    %229 = arith.addf %224, %228 : vector<64x1xf32>
    %cst_58 = arith.constant 1.000000e+30 : f32
    %230 = vector.broadcast %cst_58 : f32 to vector<64x128xf32>
    %231 = arith.select %208, %230, %160 : vector<64x128xi1>, vector<64x128xf32>
    %cst_59 = arith.constant 1.000000e+30 : f32
    %232 = vector.broadcast %cst_59 : f32 to vector<64x128xf32>
    %233 = arith.select %211, %232, %162 : vector<64x128xi1>, vector<64x128xf32>
    %c2_i32 = arith.constant 2 : i32
    %234 = vector.broadcast %c2_i32 : i32 to vector<1x128xi32>
    %235 = arith.cmpi eq, %10, %234 : vector<1x128xi32>
    %236 = vector.shape_cast %235 : vector<1x128xi1> to vector<1x128xi1>
    %237 = vector.broadcast %236 : vector<1x128xi1> to vector<64x128xi1>
    %238 = vector.shape_cast %189 : vector<64x1xf32> to vector<64x1xf32>
    %239 = vector.broadcast %238 : vector<64x1xf32> to vector<64x128xf32>
    %240 = arith.select %237, %239, %169 : vector<64x128xi1>, vector<64x128xf32>
    %241 = vector.shape_cast %235 : vector<1x128xi1> to vector<1x128xi1>
    %242 = vector.broadcast %241 : vector<1x128xi1> to vector<64x128xi1>
    %243 = vector.shape_cast %204 : vector<64x1xf32> to vector<64x1xf32>
    %244 = vector.broadcast %243 : vector<64x1xf32> to vector<64x128xf32>
    %245 = arith.select %242, %244, %174 : vector<64x128xi1>, vector<64x128xf32>
    %246 = vector.shape_cast %235 : vector<1x128xi1> to vector<1x128xi1>
    %247 = vector.broadcast %246 : vector<1x128xi1> to vector<64x128xi1>
    %248 = vector.shape_cast %220 : vector<64x1xf32> to vector<64x1xf32>
    %249 = vector.broadcast %248 : vector<64x1xf32> to vector<64x128xf32>
    %250 = arith.select %247, %249, %179 : vector<64x128xi1>, vector<64x128xf32>
    %251 = vector.shape_cast %235 : vector<1x128xi1> to vector<1x128xi1>
    %252 = vector.broadcast %251 : vector<1x128xi1> to vector<64x128xi1>
    %253 = vector.shape_cast %229 : vector<64x1xf32> to vector<64x1xf32>
    %254 = vector.broadcast %253 : vector<64x1xf32> to vector<64x128xf32>
    %255 = arith.select %252, %254, %184 : vector<64x128xi1>, vector<64x128xf32>
    %cst_60 = arith.constant dense<0x7F800000> : vector<64xf32>
    %256 = vector.multi_reduction <minimumf>, %231, %cst_60 [1] : vector<64x128xf32> to vector<64xf32>
    %257 = vector.shape_cast %256 : vector<64xf32> to vector<64x1xf32>
    %cst_61 = arith.constant dense<0x7F800000> : vector<64xf32>
    %258 = vector.multi_reduction <minimumf>, %233, %cst_61 [1] : vector<64x128xf32> to vector<64xf32>
    %259 = vector.shape_cast %258 : vector<64xf32> to vector<64x1xf32>
    %260 = arith.minimumf %257, %259 : vector<64x1xf32>
    %261 = vector.broadcast %260 : vector<64x1xf32> to vector<64x128xf32>
    %262 = arith.cmpf ole, %231, %261 : vector<64x128xf32>
    %263 = vector.broadcast %260 : vector<64x1xf32> to vector<64x128xf32>
    %264 = arith.cmpf ole, %233, %263 : vector<64x128xf32>
    %cst_62 = arith.constant 1.000000e+30 : f32
    %265 = vector.shape_cast %33 : vector<1x128xf32> to vector<1x128xf32>
    %266 = vector.broadcast %265 : vector<1x128xf32> to vector<64x128xf32>
    %267 = vector.broadcast %cst_62 : f32 to vector<64x128xf32>
    %268 = arith.select %262, %266, %267 : vector<64x128xi1>, vector<64x128xf32>
    %cst_63 = arith.constant dense<0x7F800000> : vector<64xf32>
    %269 = vector.multi_reduction <minimumf>, %268, %cst_63 [1] : vector<64x128xf32> to vector<64xf32>
    %270 = vector.shape_cast %269 : vector<64xf32> to vector<64x1xf32>
    %cst_64 = arith.constant 1.000000e+30 : f32
    %271 = vector.broadcast %cst_64 : f32 to vector<64x128xf32>
    %272 = arith.select %264, %12, %271 : vector<64x128xi1>, vector<64x128xf32>
    %cst_65 = arith.constant dense<0x7F800000> : vector<64xf32>
    %273 = vector.multi_reduction <minimumf>, %272, %cst_65 [1] : vector<64x128xf32> to vector<64xf32>
    %274 = vector.shape_cast %273 : vector<64xf32> to vector<64x1xf32>
    %275 = arith.minimumf %270, %274 : vector<64x1xf32>
    %276 = vector.broadcast %33 : vector<1x128xf32> to vector<64x128xf32>
    %277 = vector.broadcast %275 : vector<64x1xf32> to vector<64x128xf32>
    %278 = arith.cmpf oeq, %276, %277 : vector<64x128xf32>
    %279 = arith.andi %262, %278 : vector<64x128xi1>
    %280 = vector.broadcast %275 : vector<64x1xf32> to vector<64x128xf32>
    %281 = arith.cmpf oeq, %12, %280 : vector<64x128xf32>
    %282 = arith.andi %264, %281 : vector<64x128xi1>
    %cst_66 = arith.constant 0.000000e+00 : f32
    %283 = vector.broadcast %cst_66 : f32 to vector<64x128xf32>
    %284 = arith.select %279, %23, %283 : vector<64x128xi1>, vector<64x128xf32>
    %cst_67 = arith.constant dense<0.000000e+00> : vector<64xf32>
    %285 = vector.multi_reduction <add>, %284, %cst_67 [1] : vector<64x128xf32> to vector<64xf32>
    %286 = vector.shape_cast %285 : vector<64xf32> to vector<64x1xf32>
    %cst_68 = arith.constant 0.000000e+00 : f32
    %287 = vector.broadcast %cst_68 : f32 to vector<64x128xf32>
    %288 = arith.select %282, %13, %287 : vector<64x128xi1>, vector<64x128xf32>
    %cst_69 = arith.constant dense<0.000000e+00> : vector<64xf32>
    %289 = vector.multi_reduction <add>, %288, %cst_69 [1] : vector<64x128xf32> to vector<64xf32>
    %290 = vector.shape_cast %289 : vector<64xf32> to vector<64x1xf32>
    %291 = arith.addf %286, %290 : vector<64x1xf32>
    %cst_70 = arith.constant 0.000000e+00 : f32
    %292 = vector.broadcast %cst_70 : f32 to vector<64x128xf32>
    %293 = arith.select %279, %26, %292 : vector<64x128xi1>, vector<64x128xf32>
    %cst_71 = arith.constant dense<0.000000e+00> : vector<64xf32>
    %294 = vector.multi_reduction <add>, %293, %cst_71 [1] : vector<64x128xf32> to vector<64xf32>
    %295 = vector.shape_cast %294 : vector<64xf32> to vector<64x1xf32>
    %cst_72 = arith.constant 0.000000e+00 : f32
    %296 = vector.broadcast %cst_72 : f32 to vector<64x128xf32>
    %297 = arith.select %282, %14, %296 : vector<64x128xi1>, vector<64x128xf32>
    %cst_73 = arith.constant dense<0.000000e+00> : vector<64xf32>
    %298 = vector.multi_reduction <add>, %297, %cst_73 [1] : vector<64x128xf32> to vector<64xf32>
    %299 = vector.shape_cast %298 : vector<64xf32> to vector<64x1xf32>
    %300 = arith.addf %295, %299 : vector<64x1xf32>
    %c3_i32 = arith.constant 3 : i32
    %301 = vector.broadcast %c3_i32 : i32 to vector<1x128xi32>
    %302 = arith.cmpi eq, %10, %301 : vector<1x128xi32>
    %303 = vector.shape_cast %302 : vector<1x128xi1> to vector<1x128xi1>
    %304 = vector.broadcast %303 : vector<1x128xi1> to vector<64x128xi1>
    %305 = vector.shape_cast %260 : vector<64x1xf32> to vector<64x1xf32>
    %306 = vector.broadcast %305 : vector<64x1xf32> to vector<64x128xf32>
    %307 = arith.select %304, %306, %240 : vector<64x128xi1>, vector<64x128xf32>
    %308 = vector.shape_cast %302 : vector<1x128xi1> to vector<1x128xi1>
    %309 = vector.broadcast %308 : vector<1x128xi1> to vector<64x128xi1>
    %310 = vector.shape_cast %275 : vector<64x1xf32> to vector<64x1xf32>
    %311 = vector.broadcast %310 : vector<64x1xf32> to vector<64x128xf32>
    %312 = arith.select %309, %311, %245 : vector<64x128xi1>, vector<64x128xf32>
    %313 = vector.shape_cast %302 : vector<1x128xi1> to vector<1x128xi1>
    %314 = vector.broadcast %313 : vector<1x128xi1> to vector<64x128xi1>
    %315 = vector.shape_cast %291 : vector<64x1xf32> to vector<64x1xf32>
    %316 = vector.broadcast %315 : vector<64x1xf32> to vector<64x128xf32>
    %317 = arith.select %314, %316, %250 : vector<64x128xi1>, vector<64x128xf32>
    %318 = vector.shape_cast %302 : vector<1x128xi1> to vector<1x128xi1>
    %319 = vector.broadcast %318 : vector<1x128xi1> to vector<64x128xi1>
    %320 = vector.shape_cast %300 : vector<64x1xf32> to vector<64x1xf32>
    %321 = vector.broadcast %320 : vector<64x1xf32> to vector<64x128xf32>
    %322 = arith.select %319, %321, %255 : vector<64x128xi1>, vector<64x128xf32>
    %c1_i32_74 = arith.constant 1 : i32
    %c0_75 = arith.constant 0 : index
    %c0_76 = arith.constant 0 : index
    %323 = vector.load %arg3[%c0_75, %c0_76] : memref<64x128xf32, #tpu.memory_space<vmem>>, vector<64x128xf32>
    tpu.vector_store %arg3[%c0_75, %c0_76], %317 {strides = array<i32>} : memref<64x128xf32, #tpu.memory_space<vmem>>, vector<64x128xf32>,
    %c0_77 = arith.constant 0 : index
    %c0_78 = arith.constant 0 : index
    %324 = vector.load %arg4[%c0_77, %c0_78] : memref<64x128xf32, #tpu.memory_space<vmem>>, vector<64x128xf32>
    tpu.vector_store %arg4[%c0_77, %c0_78], %322 {strides = array<i32>} : memref<64x128xf32, #tpu.memory_space<vmem>>, vector<64x128xf32>,
    return
  }
  func.func @transform_0(%arg0: i32) -> (i32, i32) {
    %c0_i32 = arith.constant 0 : i32
    %c0_i32_0 = arith.constant 0 : i32
    %c0_i32_1 = arith.constant 0 : i32
    return %c0_i32, %c0_i32_0 : i32, i32
  }
  func.func @transform_1(%arg0: i32) -> (i32, i32) {
    %c0_i32 = arith.constant 0 : i32
    %c0_i32_0 = arith.constant 0 : i32
    return %arg0, %c0_i32 : i32, i32
  }
  func.func @transform_2(%arg0: i32) -> (i32, i32) {
    %c0_i32 = arith.constant 0 : i32
    %c0_i32_0 = arith.constant 0 : i32
    return %arg0, %c0_i32 : i32, i32
  }
  func.func @transform_3(%arg0: i32) -> (i32, i32) {
    %c0_i32 = arith.constant 0 : i32
    %c0_i32_0 = arith.constant 0 : i32
    return %arg0, %c0_i32 : i32, i32
  }
}

</mosaic_0001>

<llo_original>
// kernel: tpu_custom_call.1
$region0: #{tpu_custom_call.1}
  #allocation0 [shape = 'u32[]', space=smem, size = 0x4, offset = 0x4, fixed_abs, tag = 'smem constant byte address 0x4 - core index']
  #allocation1 [shape = 'u32[144,128]{1,0:T(1,128)}', space=vmem, size = 0x12000, scoped, tag = 'internal scratch']
  %s0 = inlined_call_operand.vmem [shape: f32[2,128], index: 0, kind: input, shape index: {}]
  %s1 = inlined_call_operand.vmem [shape: f32[128,2], index: 1, kind: input, shape index: {}]
  %s2 = inlined_call_operand.hbm [shape: f32[128,128], index: 2, kind: output, shape index: {0}]
  %s3 = inlined_call_operand.hbm [shape: f32[128,128], index: 3, kind: output, shape index: {1}]
  %4 = xla_tuple %s2, %s3
  %s5 = sld [smem:[#allocation0]]
  $region49: #{tpu_custom_call.1} parent=0
    _
  %s7 = ssub.s32 1, %s5
  %s8 = scalar_select 0, %s7, %s5
  $region1: #{tpu_custom_call.1} parent=0
    #allocation2 [shape = 'u8[65536]{0}', space=vmem, size = 0x10000, scoped, tag = 'output window, operand 0']
    #allocation3 [shape = 's32[2]{0}', space=sflag, size = 0x8, scoped, tag = 'scoped memory for tpu_custom_call.1']
    #allocation4 [shape = 'u8[65536]{0}', space=vmem, size = 0x10000, scoped, tag = 'output window, operand 1']
    #allocation5 [shape = 's32[2]{0}', space=sflag, size = 0x8, scoped, tag = 'scoped memory for tpu_custom_call.1']
    %9 = vsyncpa [#allocation3], 0
    %s10 = scalar_lea.sflag [#allocation3], 1
    %11 = vsyncpa %s10, 0
    %12 = vsyncpa [#allocation5], 0
    %s13 = scalar_lea.sflag [#allocation5], 1
    %14 = vsyncpa %s13, 0
    loop: start=0, step=1, limit=4
    $region2: #{tpu_custom_call.1} parent=1 // loop_pre_header
      _
    $region3: #{tpu_custom_call.1} parent=1 // loop_header
      %s16 = sphi 0, %s20
      %p17 = scmp.ge.s32.totalorder %s16, 4
      %s24 = sphi 0, %s24
      %s26 = sphi 0, %s24
      %s27 = sphi 0, %s26
      %s41 = sphi 0, %s27
      %s47 = sphi 0, %s49
      %s50 = sphi 0, %s47
      %s51 = sphi 0, %s50
      %s67 = sphi 0, %s51
      %s73 = sphi 0, %s75
      %s76 = sphi 0, %s73
      %s77 = sphi 0, %s76
      %s93 = sphi 0, %s77
      %s99 = sphi 0, %s101
      %s102 = sphi 0, %s99
      %s103 = sphi 0, %s102
      %s119 = sphi 0, %s103
    $region4: #{tpu_custom_call.1} parent=1 // loop_header_branch
      %19 = sbr.rel (%p17) target = $region8
    $region5: #{tpu_custom_call.1} parent=1 // loop_body
      %s21 = ssub.s32 %s16, 1
      %s22 = ssub.s32 %s16, 2
      %s23 = sadd.s32 %s16, 1
      %s25 = sadd.s32 %s24, 1
      %p28 = scmp.eq.s32.totalorder %s16, 1
      %p29 = scmp.ne.s32.totalorder %s24, %s26
      %p30 = scmp.eq.s32.totalorder %s16, 0
      %p31 = por %p29, %p30
      %p32 = scmp.ne.s32.totalorder %s24, %s26
      %p33 = scmp.eq.s32.totalorder %s21, 1
      %p34 = por %p32, %p33
      %p35 = scmp.ne.s32.totalorder %s26, %s27
      %p36 = scmp.eq.s32.totalorder %s21, 0
      %p37 = por %p35, %p36
      %p38 = scmp.ne.s32.totalorder %s26, %s27
      %p39 = scmp.eq.s32.totalorder %s22, 1
      %p40 = por %p38, %p39
      %p42 = scmp.ne.s32.totalorder %s27, %s41
      %p43 = scmp.eq.s32.totalorder %s22, 0
      %p44 = por %p42, %p43
      %s45 = ssub.s32 %s16, %s23
      %p46 = scmp.eq.s32.totalorder %s45, 0
      %s48 = sadd.s32 %s47, 1
      %s49 = scalar_select %p46, %s47, %s48
      %p52 = pneg %p46
      %p53 = scmp.eq.s32.totalorder %s16, 1
      %p54 = por %p52, %p53
      %p55 = scmp.ne.s32.totalorder %s47, %s50
      %p56 = scmp.eq.s32.totalorder %s16, 0
      %p57 = por %p55, %p56
      %p58 = scmp.ne.s32.totalorder %s47, %s50
      %p59 = scmp.eq.s32.totalorder %s21, 1
      %p60 = por %p58, %p59
      %p61 = scmp.ne.s32.totalorder %s50, %s51
      %p62 = scmp.eq.s32.totalorder %s21, 0
      %p63 = por %p61, %p62
      %p64 = scmp.ne.s32.totalorder %s50, %s51
      %p65 = scmp.eq.s32.totalorder %s22, 1
      %p66 = por %p64, %p65
      %p68 = scmp.ne.s32.totalorder %s51, %s67
      %p69 = scmp.eq.s32.totalorder %s22, 0
      %p70 = por %p68, %p69
      %s71 = ssub.s32 %s16, %s23
      %p72 = scmp.eq.s32.totalorder %s71, 0
      %s74 = sadd.s32 %s73, 1
      %s75 = scalar_select %p72, %s73, %s74
      %p78 = pneg %p72
      %p79 = scmp.eq.s32.totalorder %s16, 1
      %p80 = por %p78, %p79
      %p81 = scmp.ne.s32.totalorder %s73, %s76
      %p82 = scmp.eq.s32.totalorder %s16, 0
      %p83 = por %p81, %p82
      %p84 = scmp.ne.s32.totalorder %s73, %s76
      %p85 = scmp.eq.s32.totalorder %s21, 1
      %p86 = por %p84, %p85
      %p87 = scmp.ne.s32.totalorder %s76, %s77
      %p88 = scmp.eq.s32.totalorder %s21, 0
      %p89 = por %p87, %p88
      %p90 = scmp.ne.s32.totalorder %s76, %s77
      %p91 = scmp.eq.s32.totalorder %s22, 1
      %p92 = por %p90, %p91
      %p94 = scmp.ne.s32.totalorder %s77, %s93
      %p95 = scmp.eq.s32.totalorder %s22, 0
      %p96 = por %p94, %p95
      %s97 = ssub.s32 %s16, %s23
      %p98 = scmp.eq.s32.totalorder %s97, 0
      %s100 = sadd.s32 %s99, 1
      %s101 = scalar_select %p98, %s99, %s100
      %p104 = pneg %p98
      %p105 = scmp.eq.s32.totalorder %s16, 1
      %p106 = por %p104, %p105
      %p107 = scmp.ne.s32.totalorder %s99, %s102
      %p108 = scmp.eq.s32.totalorder %s16, 0
      %p109 = por %p107, %p108
      %p110 = scmp.ne.s32.totalorder %s99, %s102
      %p111 = scmp.eq.s32.totalorder %s21, 1
      %p112 = por %p110, %p111
      %p113 = scmp.ne.s32.totalorder %s102, %s103
      %p114 = scmp.eq.s32.totalorder %s21, 0
      %p115 = por %p113, %p114
      %p116 = scmp.ne.s32.totalorder %s102, %s103
      %p117 = scmp.eq.s32.totalorder %s22, 1
      %p118 = por %p116, %p117
      %p120 = scmp.ne.s32.totalorder %s103, %s119
      %p121 = scmp.eq.s32.totalorder %s22, 0
      %p122 = por %p120, %p121
      %p123 = scmp.le.s32.totalorder 1, %s16
      %p124 = scmp.lt.s32.totalorder %s16, 3
      %p125 = pnand %p123, %p124
      %p126 = pneg %p125
      // Predicated region
      $region9: #{tpu_custom_call.1} parent=5 // pred_check
        _
      $region10: #{tpu_custom_call.1} parent=5 // pred_check_branch
        %128 = sbr.rel (%p125) target = $region12
      $region11: #{tpu_custom_call.1} parent=5 // pred_region
        %s129 = ssub.s32 %s16, 1
        // Predicated region
        $region13: #{tpu_custom_call.1} parent=11 // pred_check
          %p130 = pneg %p37
        $region14: #{tpu_custom_call.1} parent=11 // pred_check_branch
          %132 = sbr.rel (%p130) target = $region16
        $region15: #{tpu_custom_call.1} parent=11 // pred_region
          _
        $region16: #{tpu_custom_call.1} parent=11 // pred_fallthru
          _
      $region12: #{tpu_custom_call.1} parent=5 // pred_fallthru
        _
      %p133 = scmp.lt.s32.totalorder %s16, 2
      // Predicated region
      $region17: #{tpu_custom_call.1} parent=5 // pred_check
        %p134 = pneg %p133
      $region18: #{tpu_custom_call.1} parent=5 // pred_check_branch
        %136 = sbr.rel (%p134) target = $region20
      $region19: #{tpu_custom_call.1} parent=5 // pred_region
        // Predicated region
        $region21: #{tpu_custom_call.1} parent=19 // pred_check
          %p137 = pneg %p57
        $region22: #{tpu_custom_call.1} parent=19 // pred_check_branch
          %139 = sbr.rel (%p137) target = $region24
        $region23: #{tpu_custom_call.1} parent=19 // pred_region
          %s140 = smul.u32 8, %s16
          %p141 = scmp.lt.s32.totalorder %s140, 15
          %s142 = scalar_select %p141, %s140, 15
          %s143 = smul.addr %s142, 8
          %s144 = scalar_lea.vmem %s1, %s143
          %s145 = smul.u32 8, %s16
        $region24: #{tpu_custom_call.1} parent=19 // pred_fallthru
          _
      $region20: #{tpu_custom_call.1} parent=5 // pred_fallthru
        _
      %p146 = scmp.le.s32.totalorder 1, %s16
      %p147 = scmp.lt.s32.totalorder %s16, 3
      %p148 = pnand %p146, %p147
      %p149 = pneg %p148
      // Predicated region
      $region25: #{tpu_custom_call.1} parent=5 // pred_check
        _
      $region26: #{tpu_custom_call.1} parent=5 // pred_check_branch
        %151 = sbr.rel (%p148) target = $region28
      $region27: #{tpu_custom_call.1} parent=5 // pred_region
        %s152 = ssub.s32 %s16, 1
        %p153 = pneg %p37
        %p154 = pneg %p34
        %s155 = smul.u32 8, %s21
        %p156 = scmp.lt.s32.totalorder %s155, 15
        %s157 = scalar_select %p156, %s155, 15
        %s158 = smul.addr %s157, 8
        %s159 = scalar_lea.vmem %s1, %s158
        %p160 = pneg %p63
        %p161 = pneg %p60
        %p162 = pneg %p89
        %p163 = pneg %p86
        %s164 = sand.u32 %s76, 1
        %s165 = scalar_lea.sflag [#allocation3], %s164
        %s166 = sand.u32 %s76, 1
        %s167 = smul.addr %s166, 64
        %s168 = scalar_lea.vmem [#allocation2], %s167
        %p169 = pneg %p115
        %p170 = pneg %p112
        %s171 = sand.u32 %s102, 1
        %s172 = scalar_lea.sflag [#allocation5], %s171
        %s173 = sand.u32 %s102, 1
        %s174 = smul.addr %s173, 64
        %s175 = scalar_lea.vmem [#allocation4], %s174
        %s176 = smul.u32 8, %s21
        %p177 = scmp.lt.s32.totalorder %s176, 15
        %s178 = scalar_select %p177, %s176, 15
        %s179 = smul.addr %s178, 8
        %s180 = scalar_lea.vmem %s1, %s179
        %s181 = smul.u32 8, %s21
        %s182 = smul.u32 8, %s21
        %s183 = smul.u32 8, %s21
        %s184 = smul.u32 %s21, 64
        %v185 = vld [vmem:[%s180] sm:$0xff]
        %v186 = vld [vmem:[%s180 + $0x8] sm:$0xff]
        %v187 = vld [vmem:[%s180 + $0x10] sm:$0xff]
        %v188 = vld [vmem:[%s180 + $0x18] sm:$0xff]
        %v189 = vld [vmem:[%s180 + $0x20] sm:$0xff]
        %v190 = vld [vmem:[%s180 + $0x28] sm:$0xff]
        %v191 = vld [vmem:[%s180 + $0x30] sm:$0xff]
        %v192 = vld [vmem:[%s180 + $0x38] sm:$0xff]
        %v193 = vlaneseq
        %v194 = vshrl.u32 %v193, 7
        %v195 = vadd.s32 %v194, 8
        %v196 = vadd.s32 %v194, 16
        %v197 = vadd.s32 %v194, 24
        %v198 = vadd.s32 %v194, 32
        %v199 = vadd.s32 %v194, 40
        %v200 = vadd.s32 %v194, 48
        %v201 = vadd.s32 %v194, 56
        %v202 = vstv %s184
        %v203 = vadd.s32 %v194, %v202
        %v204 = vadd.s32 %v195, %v202
        %v205 = vadd.s32 %v196, %v202
        %v206 = vadd.s32 %v197, %v202
        %v207 = vadd.s32 %v198, %v202
        %v208 = vadd.s32 %v199, %v202
        %v209 = vadd.s32 %v200, %v202
        %v210 = vadd.s32 %v201, %v202
        %v211 = vcvt.s32.f32 %v203
        %v212 = vcvt.s32.f32 %v204
        %v213 = vcvt.s32.f32 %v205
        %v214 = vcvt.s32.f32 %v206
        %v215 = vcvt.s32.f32 %v207
        %v216 = vcvt.s32.f32 %v208
        %v217 = vcvt.s32.f32 %v209
        %v218 = vcvt.s32.f32 %v210
        %v219 = vlaneseq
        %v220 = vand.u32 %v219, 127
        %v221 = vcvt.s32.f32 %v220
        %v222 = vld [vmem:[%s0] sm:$0x3]
        %224 = vset.pattern.permute.xlu0 0
        %225 = vperm.xlu0 %224, %v185
        %v226 = vpop.permute.xlu0 %225
        %229 = vset.pattern.permute.xlu0 0
        %230 = vperm.xlu0 %229, %v186
        %v231 = vpop.permute.xlu0 %230
        %234 = vset.pattern.permute.xlu0 0
        %235 = vperm.xlu0 %234, %v187
        %v236 = vpop.permute.xlu0 %235
        %239 = vset.pattern.permute.xlu0 0
        %240 = vperm.xlu0 %239, %v188
        %v241 = vpop.permute.xlu0 %240
        %244 = vset.pattern.permute.xlu0 0
        %245 = vperm.xlu0 %244, %v189
        %v246 = vpop.permute.xlu0 %245
        %249 = vset.pattern.permute.xlu0 0
        %250 = vperm.xlu0 %249, %v190
        %v251 = vpop.permute.xlu0 %250
        %254 = vset.pattern.permute.xlu0 0
        %255 = vperm.xlu0 %254, %v191
        %v256 = vpop.permute.xlu0 %255
        %259 = vset.pattern.permute.xlu0 0
        %260 = vperm.xlu0 %259, %v192
        %v261 = vpop.permute.xlu0 %260
        %v263 = vlaneseq
        %v264 = vshrl.u32 %v263, 7
        %v265 = vsub.s32 0, %v264
        %v266 = vrot.slane %v222, %v265
        %v267 = vsub.f32 %v226, %v266
        %v268 = vsub.f32 %v231, %v266
        %v269 = vsub.f32 %v236, %v266
        %v270 = vsub.f32 %v241, %v266
        %v271 = vsub.f32 %v246, %v266
        %v272 = vsub.f32 %v251, %v266
        %v273 = vsub.f32 %v256, %v266
        %v274 = vsub.f32 %v261, %v266
        %275 = vset.pattern.permute.xlu0 1
        %276 = vperm.xlu0 %275, %v185
        %v277 = vpop.permute.xlu0 %276
        %279 = vset.pattern.permute.xlu0 1
        %280 = vperm.xlu0 %279, %v186
        %v281 = vpop.permute.xlu0 %280
        %283 = vset.pattern.permute.xlu0 1
        %284 = vperm.xlu0 %283, %v187
        %v285 = vpop.permute.xlu0 %284
        %287 = vset.pattern.permute.xlu0 1
        %288 = vperm.xlu0 %287, %v188
        %v289 = vpop.permute.xlu0 %288
        %291 = vset.pattern.permute.xlu0 1
        %292 = vperm.xlu0 %291, %v189
        %v293 = vpop.permute.xlu0 %292
        %295 = vset.pattern.permute.xlu0 1
        %296 = vperm.xlu0 %295, %v190
        %v297 = vpop.permute.xlu0 %296
        %299 = vset.pattern.permute.xlu0 1
        %300 = vperm.xlu0 %299, %v191
        %v301 = vpop.permute.xlu0 %300
        %303 = vset.pattern.permute.xlu0 1
        %304 = vperm.xlu0 %303, %v192
        %v305 = vpop.permute.xlu0 %304
        %v307 = vlaneseq
        %v308 = vshrl.u32 %v307, 7
        %v309 = vsub.s32 1, %v308
        %v310 = vrot.slane %v222, %v309
        %v311 = vsub.f32 %v277, %v310
        %v312 = vsub.f32 %v281, %v310
        %v313 = vsub.f32 %v285, %v310
        %v314 = vsub.f32 %v289, %v310
        %v315 = vsub.f32 %v293, %v310
        %v316 = vsub.f32 %v297, %v310
        %v317 = vsub.f32 %v301, %v310
        %v318 = vsub.f32 %v305, %v310
        %v319 = vmul.f32 %v267, %v267
        %v320 = vmul.f32 %v268, %v268
        %v321 = vmul.f32 %v269, %v269
        %v322 = vmul.f32 %v270, %v270
        %v323 = vmul.f32 %v271, %v271
        %v324 = vmul.f32 %v272, %v272
        %v325 = vmul.f32 %v273, %v273
        %v326 = vmul.f32 %v274, %v274
        %v327 = vmul.f32 %v311, %v311
        %v328 = vmul.f32 %v312, %v312
        %v329 = vmul.f32 %v313, %v313
        %v330 = vmul.f32 %v314, %v314
        %v331 = vmul.f32 %v315, %v315
        %v332 = vmul.f32 %v316, %v316
        %v333 = vmul.f32 %v317, %v317
        %v334 = vmul.f32 %v318, %v318
        %v335 = vadd.f32 %v319, %v327
        %v336 = vadd.f32 %v320, %v328
        %v337 = vadd.f32 %v321, %v329
        %v338 = vadd.f32 %v322, %v330
        %v339 = vadd.f32 %v323, %v331
        %v340 = vadd.f32 %v324, %v332
        %v341 = vadd.f32 %v325, %v333
        %v342 = vadd.f32 %v326, %v334
        %v343 = vadd.f32 %v221, 0.0
        %vm344 = vcmp.eq.f32.partialorder %v343, %v211
        %vm345 = vcmp.eq.f32.partialorder %v343, %v212
        %vm346 = vcmp.eq.f32.partialorder %v343, %v213
        %vm347 = vcmp.eq.f32.partialorder %v343, %v214
        %vm348 = vcmp.eq.f32.partialorder %v343, %v215
        %vm349 = vcmp.eq.f32.partialorder %v343, %v216
        %vm350 = vcmp.eq.f32.partialorder %v343, %v217
        %vm351 = vcmp.eq.f32.partialorder %v343, %v218
        %v352 = vsel %vm344, 1e+30, %v335
        %v353 = vsel %vm345, 1e+30, %v336
        %v354 = vsel %vm346, 1e+30, %v337
        %v355 = vsel %vm347, 1e+30, %v338
        %v356 = vsel %vm348, 1e+30, %v339
        %v357 = vsel %vm349, 1e+30, %v340
        %v358 = vsel %vm350, 1e+30, %v341
        %v359 = vsel %vm351, 1e+30, %v342
        %360 = vmin.xlane.f32.xlu0 %v352
        %v361 = vpop.xlane.xlu0 %360
        %362 = vmin.xlane.f32.xlu0 %v353
        %v363 = vpop.xlane.xlu0 %362
        %364 = vmin.xlane.f32.xlu0 %v354
        %v365 = vpop.xlane.xlu0 %364
        %366 = vmin.xlane.f32.xlu0 %v355
        %v367 = vpop.xlane.xlu0 %366
        %368 = vmin.xlane.f32.xlu0 %v356
        %v369 = vpop.xlane.xlu0 %368
        %370 = vmin.xlane.f32.xlu0 %v357
        %v371 = vpop.xlane.xlu0 %370
        %372 = vmin.xlane.f32.xlu0 %v358
        %v373 = vpop.xlane.xlu0 %372
        %374 = vmin.xlane.f32.xlu0 %v359
        %v375 = vpop.xlane.xlu0 %374
        %v376 = vmin.f32 %v361, 1e+30
        %v377 = vmin.f32 %v363, 1e+30
        %v378 = vmin.f32 %v365, 1e+30
        %v379 = vmin.f32 %v367, 1e+30
        %v380 = vmin.f32 %v369, 1e+30
        %v381 = vmin.f32 %v371, 1e+30
        %v382 = vmin.f32 %v373, 1e+30
        %v383 = vmin.f32 %v375, 1e+30
        %vm384 = vcmp.le.f32.partialorder %v352, %v376
        %vm385 = vcmp.le.f32.partialorder %v353, %v377
        %vm386 = vcmp.le.f32.partialorder %v354, %v378
        %vm387 = vcmp.le.f32.partialorder %v355, %v379
        %vm388 = vcmp.le.f32.partialorder %v356, %v380
        %vm389 = vcmp.le.f32.partialorder %v357, %v381
        %vm390 = vcmp.le.f32.partialorder %v358, %v382
        %vm391 = vcmp.le.f32.partialorder %v359, %v383
        %v392 = vsel %vm384, %v343, 1e+30
        %v393 = vsel %vm385, %v343, 1e+30
        %v394 = vsel %vm386, %v343, 1e+30
        %v395 = vsel %vm387, %v343, 1e+30
        %v396 = vsel %vm388, %v343, 1e+30
        %v397 = vsel %vm389, %v343, 1e+30
        %v398 = vsel %vm390, %v343, 1e+30
        %v399 = vsel %vm391, %v343, 1e+30
        %400 = vmin.xlane.f32.xlu0 %v392
        %v401 = vpop.xlane.xlu0 %400
        %402 = vmin.xlane.f32.xlu0 %v393
        %v403 = vpop.xlane.xlu0 %402
        %404 = vmin.xlane.f32.xlu0 %v394
        %v405 = vpop.xlane.xlu0 %404
        %406 = vmin.xlane.f32.xlu0 %v395
        %v407 = vpop.xlane.xlu0 %406
        %408 = vmin.xlane.f32.xlu0 %v396
        %v409 = vpop.xlane.xlu0 %408
        %410 = vmin.xlane.f32.xlu0 %v397
        %v411 = vpop.xlane.xlu0 %410
        %412 = vmin.xlane.f32.xlu0 %v398
        %v413 = vpop.xlane.xlu0 %412
        %414 = vmin.xlane.f32.xlu0 %v399
        %v415 = vpop.xlane.xlu0 %414
        %v416 = vmin.f32 %v401, 1e+30
        %v417 = vmin.f32 %v403, 1e+30
        %v418 = vmin.f32 %v405, 1e+30
        %v419 = vmin.f32 %v407, 1e+30
        %v420 = vmin.f32 %v409, 1e+30
        %v421 = vmin.f32 %v411, 1e+30
        %v422 = vmin.f32 %v413, 1e+30
        %v423 = vmin.f32 %v415, 1e+30
        %vm424 = vcmp.eq.f32.partialorder %v343, %v416
        %vm425 = vcmp.eq.f32.partialorder %v343, %v417
        %vm426 = vcmp.eq.f32.partialorder %v343, %v418
        %vm427 = vcmp.eq.f32.partialorder %v343, %v419
        %vm428 = vcmp.eq.f32.partialorder %v343, %v420
        %vm429 = vcmp.eq.f32.partialorder %v343, %v421
        %vm430 = vcmp.eq.f32.partialorder %v343, %v422
        %vm431 = vcmp.eq.f32.partialorder %v343, %v423
        %vm432 = vmand %vm384, %vm424
        %vm433 = vmand %vm385, %vm425
        %vm434 = vmand %vm386, %vm426
        %vm435 = vmand %vm387, %vm427
        %vm436 = vmand %vm388, %vm428
        %vm437 = vmand %vm389, %vm429
        %vm438 = vmand %vm390, %vm430
        %vm439 = vmand %vm391, %vm431
        %v440 = vsel %vm432, %v267, 0.0
        %v441 = vsel %vm433, %v268, 0.0
        %v442 = vsel %vm434, %v269, 0.0
        %v443 = vsel %vm435, %v270, 0.0
        %v444 = vsel %vm436, %v271, 0.0
        %v445 = vsel %vm437, %v272, 0.0
        %v446 = vsel %vm438, %v273, 0.0
        %v447 = vsel %vm439, %v274, 0.0
        %448 = vadd.xlane.f32.xlu0 %v440
        %v449 = vpop.xlane.xlu0 %448
        %450 = vadd.xlane.f32.xlu0 %v441
        %v451 = vpop.xlane.xlu0 %450
        %452 = vadd.xlane.f32.xlu0 %v442
        %v453 = vpop.xlane.xlu0 %452
        %454 = vadd.xlane.f32.xlu0 %v443
        %v455 = vpop.xlane.xlu0 %454
        %456 = vadd.xlane.f32.xlu0 %v444
        %v457 = vpop.xlane.xlu0 %456
        %458 = vadd.xlane.f32.xlu0 %v445
        %v459 = vpop.xlane.xlu0 %458
        %460 = vadd.xlane.f32.xlu0 %v446
        %v461 = vpop.xlane.xlu0 %460
        %462 = vadd.xlane.f32.xlu0 %v447
        %v463 = vpop.xlane.xlu0 %462
        %464 = vadd.xlane.f32.xlu0 0.0
        %v465 = vpop.xlane.xlu0 %464
        %v466 = vadd.f32 %v449, %v465
        %v467 = vadd.f32 %v451, %v465
        %v468 = vadd.f32 %v453, %v465
        %v469 = vadd.f32 %v455, %v465
        %v470 = vadd.f32 %v457, %v465
        %v471 = vadd.f32 %v459, %v465
        %v472 = vadd.f32 %v461, %v465
        %v473 = vadd.f32 %v463, %v465
        %v474 = vsel %vm432, %v311, 0.0
        %v475 = vsel %vm433, %v312, 0.0
        %v476 = vsel %vm434, %v313, 0.0
        %v477 = vsel %vm435, %v314, 0.0
        %v478 = vsel %vm436, %v315, 0.0
        %v479 = vsel %vm437, %v316, 0.0
        %v480 = vsel %vm438, %v317, 0.0
        %v481 = vsel %vm439, %v318, 0.0
        %482 = vadd.xlane.f32.xlu0 %v474
        %v483 = vpop.xlane.xlu0 %482
        %484 = vadd.xlane.f32.xlu0 %v475
        %v485 = vpop.xlane.xlu0 %484
        %486 = vadd.xlane.f32.xlu0 %v476
        %v487 = vpop.xlane.xlu0 %486
        %488 = vadd.xlane.f32.xlu0 %v477
        %v489 = vpop.xlane.xlu0 %488
        %490 = vadd.xlane.f32.xlu0 %v478
        %v491 = vpop.xlane.xlu0 %490
        %492 = vadd.xlane.f32.xlu0 %v479
        %v493 = vpop.xlane.xlu0 %492
        %494 = vadd.xlane.f32.xlu0 %v480
        %v495 = vpop.xlane.xlu0 %494
        %496 = vadd.xlane.f32.xlu0 %v481
        %v497 = vpop.xlane.xlu0 %496
        %v498 = vadd.f32 %v483, %v465
        %v499 = vadd.f32 %v485, %v465
        %v500 = vadd.f32 %v487, %v465
        %v501 = vadd.f32 %v489, %v465
        %v502 = vadd.f32 %v491, %v465
        %v503 = vadd.f32 %v493, %v465
        %v504 = vadd.f32 %v495, %v465
        %v505 = vadd.f32 %v497, %v465
        %v506 = vsel %vm432, 1e+30, %v352
        %v507 = vsel %vm433, 1e+30, %v353
        %v508 = vsel %vm434, 1e+30, %v354
        %v509 = vsel %vm435, 1e+30, %v355
        %v510 = vsel %vm436, 1e+30, %v356
        %v511 = vsel %vm437, 1e+30, %v357
        %v512 = vsel %vm438, 1e+30, %v358
        %v513 = vsel %vm439, 1e+30, %v359
        %vm514 = vcmp.eq.s32.totalorder %v220, 0
        %v515 = vsel %vm514, 1, 0
        %vm516 = vcmp.eq.s32.totalorder %v515, 1
        %v517 = vsel %vm516, %v466, 0.0
        %v518 = vsel %vm516, %v467, 0.0
        %v519 = vsel %vm516, %v468, 0.0
        %v520 = vsel %vm516, %v469, 0.0
        %v521 = vsel %vm516, %v470, 0.0
        %v522 = vsel %vm516, %v471, 0.0
        %v523 = vsel %vm516, %v472, 0.0
        %v524 = vsel %vm516, %v473, 0.0
        %v525 = vsel %vm516, %v498, 0.0
        %v526 = vsel %vm516, %v499, 0.0
        %v527 = vsel %vm516, %v500, 0.0
        %v528 = vsel %vm516, %v501, 0.0
        %v529 = vsel %vm516, %v502, 0.0
        %v530 = vsel %vm516, %v503, 0.0
        %v531 = vsel %vm516, %v504, 0.0
        %v532 = vsel %vm516, %v505, 0.0
        %533 = vmin.xlane.f32.xlu0 %v506
        %v534 = vpop.xlane.xlu0 %533
        %535 = vmin.xlane.f32.xlu0 %v507
        %v536 = vpop.xlane.xlu0 %535
        %537 = vmin.xlane.f32.xlu0 %v508
        %v538 = vpop.xlane.xlu0 %537
        %539 = vmin.xlane.f32.xlu0 %v509
        %v540 = vpop.xlane.xlu0 %539
        %541 = vmin.xlane.f32.xlu0 %v510
        %v542 = vpop.xlane.xlu0 %541
        %543 = vmin.xlane.f32.xlu0 %v511
        %v544 = vpop.xlane.xlu0 %543
        %545 = vmin.xlane.f32.xlu0 %v512
        %v546 = vpop.xlane.xlu0 %545
        %547 = vmin.xlane.f32.xlu0 %v513
        %v548 = vpop.xlane.xlu0 %547
        %v549 = vmin.f32 %v534, 1e+30
        %v550 = vmin.f32 %v536, 1e+30
        %v551 = vmin.f32 %v538, 1e+30
        %v552 = vmin.f32 %v540, 1e+30
        %v553 = vmin.f32 %v542, 1e+30
        %v554 = vmin.f32 %v544, 1e+30
        %v555 = vmin.f32 %v546, 1e+30
        %v556 = vmin.f32 %v548, 1e+30
        %vm557 = vcmp.le.f32.partialorder %v506, %v549
        %vm558 = vcmp.le.f32.partialorder %v507, %v550
        %vm559 = vcmp.le.f32.partialorder %v508, %v551
        %vm560 = vcmp.le.f32.partialorder %v509, %v552
        %vm561 = vcmp.le.f32.partialorder %v510, %v553
        %vm562 = vcmp.le.f32.partialorder %v511, %v554
        %vm563 = vcmp.le.f32.partialorder %v512, %v555
        %vm564 = vcmp.le.f32.partialorder %v513, %v556
        %v565 = vsel %vm557, %v343, 1e+30
        %v566 = vsel %vm558, %v343, 1e+30
        %v567 = vsel %vm559, %v343, 1e+30
        %v568 = vsel %vm560, %v343, 1e+30
        %v569 = vsel %vm561, %v343, 1e+30
        %v570 = vsel %vm562, %v343, 1e+30
        %v571 = vsel %vm563, %v343, 1e+30
        %v572 = vsel %vm564, %v343, 1e+30
        %573 = vmin.xlane.f32.xlu0 %v565
        %v574 = vpop.xlane.xlu0 %573
        %575 = vmin.xlane.f32.xlu0 %v566
        %v576 = vpop.xlane.xlu0 %575
        %577 = vmin.xlane.f32.xlu0 %v567
        %v578 = vpop.xlane.xlu0 %577
        %579 = vmin.xlane.f32.xlu0 %v568
        %v580 = vpop.xlane.xlu0 %579
        %581 = vmin.xlane.f32.xlu0 %v569
        %v582 = vpop.xlane.xlu0 %581
        %583 = vmin.xlane.f32.xlu0 %v570
        %v584 = vpop.xlane.xlu0 %583
        %585 = vmin.xlane.f32.xlu0 %v571
        %v586 = vpop.xlane.xlu0 %585
        %587 = vmin.xlane.f32.xlu0 %v572
        %v588 = vpop.xlane.xlu0 %587
        %v589 = vmin.f32 %v574, 1e+30
        %v590 = vmin.f32 %v576, 1e+30
        %v591 = vmin.f32 %v578, 1e+30
        %v592 = vmin.f32 %v580, 1e+30
        %v593 = vmin.f32 %v582, 1e+30
        %v594 = vmin.f32 %v584, 1e+30
        %v595 = vmin.f32 %v586, 1e+30
        %v596 = vmin.f32 %v588, 1e+30
        %vm597 = vcmp.eq.f32.partialorder %v343, %v589
        %vm598 = vcmp.eq.f32.partialorder %v343, %v590
        %vm599 = vcmp.eq.f32.partialorder %v343, %v591
        %vm600 = vcmp.eq.f32.partialorder %v343, %v592
        %vm601 = vcmp.eq.f32.partialorder %v343, %v593
        %vm602 = vcmp.eq.f32.partialorder %v343, %v594
        %vm603 = vcmp.eq.f32.partialorder %v343, %v595
        %vm604 = vcmp.eq.f32.partialorder %v343, %v596
        %vm605 = vmand %vm557, %vm597
        %vm606 = vmand %vm558, %vm598
        %vm607 = vmand %vm559, %vm599
        %vm608 = vmand %vm560, %vm600
        %vm609 = vmand %vm561, %vm601
        %vm610 = vmand %vm562, %vm602
        %vm611 = vmand %vm563, %vm603
        %vm612 = vmand %vm564, %vm604
        %v613 = vsel %vm605, %v267, 0.0
        %v614 = vsel %vm606, %v268, 0.0
        %v615 = vsel %vm607, %v269, 0.0
        %v616 = vsel %vm608, %v270, 0.0
        %v617 = vsel %vm609, %v271, 0.0
        %v618 = vsel %vm610, %v272, 0.0
        %v619 = vsel %vm611, %v273, 0.0
        %v620 = vsel %vm612, %v274, 0.0
        %621 = vadd.xlane.f32.xlu0 %v613
        %v622 = vpop.xlane.xlu0 %621
        %623 = vadd.xlane.f32.xlu0 %v614
        %v624 = vpop.xlane.xlu0 %623
        %625 = vadd.xlane.f32.xlu0 %v615
        %v626 = vpop.xlane.xlu0 %625
        %627 = vadd.xlane.f32.xlu0 %v616
        %v628 = vpop.xlane.xlu0 %627
        %629 = vadd.xlane.f32.xlu0 %v617
        %v630 = vpop.xlane.xlu0 %629
        %631 = vadd.xlane.f32.xlu0 %v618
        %v632 = vpop.xlane.xlu0 %631
        %633 = vadd.xlane.f32.xlu0 %v619
        %v634 = vpop.xlane.xlu0 %633
        %635 = vadd.xlane.f32.xlu0 %v620
        %v636 = vpop.xlane.xlu0 %635
        %v637 = vadd.f32 %v622, %v465
        %v638 = vadd.f32 %v624, %v465
        %v639 = vadd.f32 %v626, %v465
        %v640 = vadd.f32 %v628, %v465
        %v641 = vadd.f32 %v630, %v465
        %v642 = vadd.f32 %v632, %v465
        %v643 = vadd.f32 %v634, %v465
        %v644 = vadd.f32 %v636, %v465
        %v645 = vsel %vm605, %v311, 0.0
        %v646 = vsel %vm606, %v312, 0.0
        %v647 = vsel %vm607, %v313, 0.0
        %v648 = vsel %vm608, %v314, 0.0
        %v649 = vsel %vm609, %v315, 0.0
        %v650 = vsel %vm610, %v316, 0.0
        %v651 = vsel %vm611, %v317, 0.0
        %v652 = vsel %vm612, %v318, 0.0
        %653 = vadd.xlane.f32.xlu0 %v645
        %v654 = vpop.xlane.xlu0 %653
        %655 = vadd.xlane.f32.xlu0 %v646
        %v656 = vpop.xlane.xlu0 %655
        %657 = vadd.xlane.f32.xlu0 %v647
        %v658 = vpop.xlane.xlu0 %657
        %659 = vadd.xlane.f32.xlu0 %v648
        %v660 = vpop.xlane.xlu0 %659
        %661 = vadd.xlane.f32.xlu0 %v649
        %v662 = vpop.xlane.xlu0 %661
        %663 = vadd.xlane.f32.xlu0 %v650
        %v664 = vpop.xlane.xlu0 %663
        %665 = vadd.xlane.f32.xlu0 %v651
        %v666 = vpop.xlane.xlu0 %665
        %667 = vadd.xlane.f32.xlu0 %v652
        %v668 = vpop.xlane.xlu0 %667
        %v669 = vadd.f32 %v654, %v465
        %v670 = vadd.f32 %v656, %v465
        %v671 = vadd.f32 %v658, %v465
        %v672 = vadd.f32 %v660, %v465
        %v673 = vadd.f32 %v662, %v465
        %v674 = vadd.f32 %v664, %v465
        %v675 = vadd.f32 %v666, %v465
        %v676 = vadd.f32 %v668, %v465
        %v677 = vsel %vm605, 1e+30, %v506
        %v678 = vsel %vm606, 1e+30, %v507
        %v679 = vsel %vm607, 1e+30, %v508
        %v680 = vsel %vm608, 1e+30, %v509
        %v681 = vsel %vm609, 1e+30, %v510
        %v682 = vsel %vm610, 1e+30, %v511
        %v683 = vsel %vm611, 1e+30, %v512
        %v684 = vsel %vm612, 1e+30, %v513
        %vm685 = vcmp.eq.s32.totalorder %v220, 1
        %v686 = vsel %vm685, 1, 0
        %vm687 = vcmp.eq.s32.totalorder %v686, 1
        %v688 = vsel %vm687, %v637, %v517
        %v689 = vsel %vm687, %v638, %v518
        %v690 = vsel %vm687, %v639, %v519
        %v691 = vsel %vm687, %v640, %v520
        %v692 = vsel %vm687, %v641, %v521
        %v693 = vsel %vm687, %v642, %v522
        %v694 = vsel %vm687, %v643, %v523
        %v695 = vsel %vm687, %v644, %v524
        %v696 = vsel %vm687, %v669, %v525
        %v697 = vsel %vm687, %v670, %v526
        %v698 = vsel %vm687, %v671, %v527
        %v699 = vsel %vm687, %v672, %v528
        %v700 = vsel %vm687, %v673, %v529
        %v701 = vsel %vm687, %v674, %v530
        %v702 = vsel %vm687, %v675, %v531
        %v703 = vsel %vm687, %v676, %v532
        %704 = vmin.xlane.f32.xlu0 %v677
        %v705 = vpop.xlane.xlu0 %704
        %706 = vmin.xlane.f32.xlu0 %v678
        %v707 = vpop.xlane.xlu0 %706
        %708 = vmin.xlane.f32.xlu0 %v679
        %v709 = vpop.xlane.xlu0 %708
        %710 = vmin.xlane.f32.xlu0 %v680
        %v711 = vpop.xlane.xlu0 %710
        %712 = vmin.xlane.f32.xlu0 %v681
        %v713 = vpop.xlane.xlu0 %712
        %714 = vmin.xlane.f32.xlu0 %v682
        %v715 = vpop.xlane.xlu0 %714
        %716 = vmin.xlane.f32.xlu0 %v683
        %v717 = vpop.xlane.xlu0 %716
        %718 = vmin.xlane.f32.xlu0 %v684
        %v719 = vpop.xlane.xlu0 %718
        %v720 = vmin.f32 %v705, 1e+30
        %v721 = vmin.f32 %v707, 1e+30
        %v722 = vmin.f32 %v709, 1e+30
        %v723 = vmin.f32 %v711, 1e+30
        %v724 = vmin.f32 %v713, 1e+30
        %v725 = vmin.f32 %v715, 1e+30
        %v726 = vmin.f32 %v717, 1e+30
        %v727 = vmin.f32 %v719, 1e+30
        %vm728 = vcmp.le.f32.partialorder %v677, %v720
        %vm729 = vcmp.le.f32.partialorder %v678, %v721
        %vm730 = vcmp.le.f32.partialorder %v679, %v722
        %vm731 = vcmp.le.f32.partialorder %v680, %v723
        %vm732 = vcmp.le.f32.partialorder %v681, %v724
        %vm733 = vcmp.le.f32.partialorder %v682, %v725
        %vm734 = vcmp.le.f32.partialorder %v683, %v726
        %vm735 = vcmp.le.f32.partialorder %v684, %v727
        %v736 = vsel %vm728, %v343, 1e+30
        %v737 = vsel %vm729, %v343, 1e+30
        %v738 = vsel %vm730, %v343, 1e+30
        %v739 = vsel %vm731, %v343, 1e+30
        %v740 = vsel %vm732, %v343, 1e+30
        %v741 = vsel %vm733, %v343, 1e+30
        %v742 = vsel %vm734, %v343, 1e+30
        %v743 = vsel %vm735, %v343, 1e+30
        %744 = vmin.xlane.f32.xlu0 %v736
        %v745 = vpop.xlane.xlu0 %744
        %746 = vmin.xlane.f32.xlu0 %v737
        %v747 = vpop.xlane.xlu0 %746
        %748 = vmin.xlane.f32.xlu0 %v738
        %v749 = vpop.xlane.xlu0 %748
        %750 = vmin.xlane.f32.xlu0 %v739
        %v751 = vpop.xlane.xlu0 %750
        %752 = vmin.xlane.f32.xlu0 %v740
        %v753 = vpop.xlane.xlu0 %752
        %754 = vmin.xlane.f32.xlu0 %v741
        %v755 = vpop.xlane.xlu0 %754
        %756 = vmin.xlane.f32.xlu0 %v742
        %v757 = vpop.xlane.xlu0 %756
        %758 = vmin.xlane.f32.xlu0 %v743
        %v759 = vpop.xlane.xlu0 %758
        %v760 = vmin.f32 %v745, 1e+30
        %v761 = vmin.f32 %v747, 1e+30
        %v762 = vmin.f32 %v749, 1e+30
        %v763 = vmin.f32 %v751, 1e+30
        %v764 = vmin.f32 %v753, 1e+30
        %v765 = vmin.f32 %v755, 1e+30
        %v766 = vmin.f32 %v757, 1e+30
        %v767 = vmin.f32 %v759, 1e+30
        %vm768 = vcmp.eq.f32.partialorder %v343, %v760
        %vm769 = vcmp.eq.f32.partialorder %v343, %v761
        %vm770 = vcmp.eq.f32.partialorder %v343, %v762
        %vm771 = vcmp.eq.f32.partialorder %v343, %v763
        %vm772 = vcmp.eq.f32.partialorder %v343, %v764
        %vm773 = vcmp.eq.f32.partialorder %v343, %v765
        %vm774 = vcmp.eq.f32.partialorder %v343, %v766
        %vm775 = vcmp.eq.f32.partialorder %v343, %v767
        %vm776 = vmand %vm728, %vm768
        %vm777 = vmand %vm729, %vm769
        %vm778 = vmand %vm730, %vm770
        %vm779 = vmand %vm731, %vm771
        %vm780 = vmand %vm732, %vm772
        %vm781 = vmand %vm733, %vm773
        %vm782 = vmand %vm734, %vm774
        %vm783 = vmand %vm735, %vm775
        %v784 = vsel %vm776, %v267, 0.0
        %v785 = vsel %vm777, %v268, 0.0
        %v786 = vsel %vm778, %v269, 0.0
        %v787 = vsel %vm779, %v270, 0.0
        %v788 = vsel %vm780, %v271, 0.0
        %v789 = vsel %vm781, %v272, 0.0
        %v790 = vsel %vm782, %v273, 0.0
        %v791 = vsel %vm783, %v274, 0.0
        %792 = vadd.xlane.f32.xlu0 %v784
        %v793 = vpop.xlane.xlu0 %792
        %794 = vadd.xlane.f32.xlu0 %v785
        %v795 = vpop.xlane.xlu0 %794
        %796 = vadd.xlane.f32.xlu0 %v786
        %v797 = vpop.xlane.xlu0 %796
        %798 = vadd.xlane.f32.xlu0 %v787
        %v799 = vpop.xlane.xlu0 %798
        %800 = vadd.xlane.f32.xlu0 %v788
        %v801 = vpop.xlane.xlu0 %800
        %802 = vadd.xlane.f32.xlu0 %v789
        %v803 = vpop.xlane.xlu0 %802
        %804 = vadd.xlane.f32.xlu0 %v790
        %v805 = vpop.xlane.xlu0 %804
        %806 = vadd.xlane.f32.xlu0 %v791
        %v807 = vpop.xlane.xlu0 %806
        %v808 = vadd.f32 %v793, %v465
        %v809 = vadd.f32 %v795, %v465
        %v810 = vadd.f32 %v797, %v465
        %v811 = vadd.f32 %v799, %v465
        %v812 = vadd.f32 %v801, %v465
        %v813 = vadd.f32 %v803, %v465
        %v814 = vadd.f32 %v805, %v465
        %v815 = vadd.f32 %v807, %v465
        %v816 = vsel %vm776, %v311, 0.0
        %v817 = vsel %vm777, %v312, 0.0
        %v818 = vsel %vm778, %v313, 0.0
        %v819 = vsel %vm779, %v314, 0.0
        %v820 = vsel %vm780, %v315, 0.0
        %v821 = vsel %vm781, %v316, 0.0
        %v822 = vsel %vm782, %v317, 0.0
        %v823 = vsel %vm783, %v318, 0.0
        %824 = vadd.xlane.f32.xlu0 %v816
        %v825 = vpop.xlane.xlu0 %824
        %826 = vadd.xlane.f32.xlu0 %v817
        %v827 = vpop.xlane.xlu0 %826
        %828 = vadd.xlane.f32.xlu0 %v818
        %v829 = vpop.xlane.xlu0 %828
        %830 = vadd.xlane.f32.xlu0 %v819
        %v831 = vpop.xlane.xlu0 %830
        %832 = vadd.xlane.f32.xlu0 %v820
        %v833 = vpop.xlane.xlu0 %832
        %834 = vadd.xlane.f32.xlu0 %v821
        %v835 = vpop.xlane.xlu0 %834
        %836 = vadd.xlane.f32.xlu0 %v822
        %v837 = vpop.xlane.xlu0 %836
        %838 = vadd.xlane.f32.xlu0 %v823
        %v839 = vpop.xlane.xlu0 %838
        %v840 = vadd.f32 %v825, %v465
        %v841 = vadd.f32 %v827, %v465
        %v842 = vadd.f32 %v829, %v465
        %v843 = vadd.f32 %v831, %v465
        %v844 = vadd.f32 %v833, %v465
        %v845 = vadd.f32 %v835, %v465
        %v846 = vadd.f32 %v837, %v465
        %v847 = vadd.f32 %v839, %v465
        %v848 = vsel %vm776, 1e+30, %v677
        %v849 = vsel %vm777, 1e+30, %v678
        %v850 = vsel %vm778, 1e+30, %v679
        %v851 = vsel %vm779, 1e+30, %v680
        %v852 = vsel %vm780, 1e+30, %v681
        %v853 = vsel %vm781, 1e+30, %v682
        %v854 = vsel %vm782, 1e+30, %v683
        %v855 = vsel %vm783, 1e+30, %v684
        %vm856 = vcmp.eq.s32.totalorder %v220, 2
        %v857 = vsel %vm856, 1, 0
        %vm858 = vcmp.eq.s32.totalorder %v857, 1
        %v859 = vsel %vm858, %v808, %v688
        %v860 = vsel %vm858, %v809, %v689
        %v861 = vsel %vm858, %v810, %v690
        %v862 = vsel %vm858, %v811, %v691
        %v863 = vsel %vm858, %v812, %v692
        %v864 = vsel %vm858, %v813, %v693
        %v865 = vsel %vm858, %v814, %v694
        %v866 = vsel %vm858, %v815, %v695
        %v867 = vsel %vm858, %v840, %v696
        %v868 = vsel %vm858, %v841, %v697
        %v869 = vsel %vm858, %v842, %v698
        %v870 = vsel %vm858, %v843, %v699
        %v871 = vsel %vm858, %v844, %v700
        %v872 = vsel %vm858, %v845, %v701
        %v873 = vsel %vm858, %v846, %v702
        %v874 = vsel %vm858, %v847, %v703
        %875 = vmin.xlane.f32.xlu0 %v848
        %v876 = vpop.xlane.xlu0 %875
        %877 = vmin.xlane.f32.xlu0 %v849
        %v878 = vpop.xlane.xlu0 %877
        %879 = vmin.xlane.f32.xlu0 %v850
        %v880 = vpop.xlane.xlu0 %879
        %881 = vmin.xlane.f32.xlu0 %v851
        %v882 = vpop.xlane.xlu0 %881
        %883 = vmin.xlane.f32.xlu0 %v852
        %v884 = vpop.xlane.xlu0 %883
        %885 = vmin.xlane.f32.xlu0 %v853
        %v886 = vpop.xlane.xlu0 %885
        %887 = vmin.xlane.f32.xlu0 %v854
        %v888 = vpop.xlane.xlu0 %887
        %889 = vmin.xlane.f32.xlu0 %v855
        %v890 = vpop.xlane.xlu0 %889
        %v891 = vmin.f32 %v876, 1e+30
        %v892 = vmin.f32 %v878, 1e+30
        %v893 = vmin.f32 %v880, 1e+30
        %v894 = vmin.f32 %v882, 1e+30
        %v895 = vmin.f32 %v884, 1e+30
        %v896 = vmin.f32 %v886, 1e+30
        %v897 = vmin.f32 %v888, 1e+30
        %v898 = vmin.f32 %v890, 1e+30
        %vm899 = vcmp.le.f32.partialorder %v848, %v891
        %vm900 = vcmp.le.f32.partialorder %v849, %v892
        %vm901 = vcmp.le.f32.partialorder %v850, %v893
        %vm902 = vcmp.le.f32.partialorder %v851, %v894
        %vm903 = vcmp.le.f32.partialorder %v852, %v895
        %vm904 = vcmp.le.f32.partialorder %v853, %v896
        %vm905 = vcmp.le.f32.partialorder %v854, %v897
        %vm906 = vcmp.le.f32.partialorder %v855, %v898
        %v907 = vsel %vm899, %v343, 1e+30
        %v908 = vsel %vm900, %v343, 1e+30
        %v909 = vsel %vm901, %v343, 1e+30
        %v910 = vsel %vm902, %v343, 1e+30
        %v911 = vsel %vm903, %v343, 1e+30
        %v912 = vsel %vm904, %v343, 1e+30
        %v913 = vsel %vm905, %v343, 1e+30
        %v914 = vsel %vm906, %v343, 1e+30
        %915 = vmin.xlane.f32.xlu0 %v907
        %v916 = vpop.xlane.xlu0 %915
        %917 = vmin.xlane.f32.xlu0 %v908
        %v918 = vpop.xlane.xlu0 %917
        %919 = vmin.xlane.f32.xlu0 %v909
        %v920 = vpop.xlane.xlu0 %919
        %921 = vmin.xlane.f32.xlu0 %v910
        %v922 = vpop.xlane.xlu0 %921
        %923 = vmin.xlane.f32.xlu0 %v911
        %v924 = vpop.xlane.xlu0 %923
        %925 = vmin.xlane.f32.xlu0 %v912
        %v926 = vpop.xlane.xlu0 %925
        %927 = vmin.xlane.f32.xlu0 %v913
        %v928 = vpop.xlane.xlu0 %927
        %929 = vmin.xlane.f32.xlu0 %v914
        %v930 = vpop.xlane.xlu0 %929
        %v931 = vmin.f32 %v916, 1e+30
        %v932 = vmin.f32 %v918, 1e+30
        %v933 = vmin.f32 %v920, 1e+30
        %v934 = vmin.f32 %v922, 1e+30
        %v935 = vmin.f32 %v924, 1e+30
        %v936 = vmin.f32 %v926, 1e+30
        %v937 = vmin.f32 %v928, 1e+30
        %v938 = vmin.f32 %v930, 1e+30
        %vm939 = vcmp.eq.f32.partialorder %v343, %v931
        %vm940 = vcmp.eq.f32.partialorder %v343, %v932
        %vm941 = vcmp.eq.f32.partialorder %v343, %v933
        %vm942 = vcmp.eq.f32.partialorder %v343, %v934
        %vm943 = vcmp.eq.f32.partialorder %v343, %v935
        %vm944 = vcmp.eq.f32.partialorder %v343, %v936
        %vm945 = vcmp.eq.f32.partialorder %v343, %v937
        %vm946 = vcmp.eq.f32.partialorder %v343, %v938
        %vm947 = vmand %vm899, %vm939
        %vm948 = vmand %vm900, %vm940
        %vm949 = vmand %vm901, %vm941
        %vm950 = vmand %vm902, %vm942
        %vm951 = vmand %vm903, %vm943
        %vm952 = vmand %vm904, %vm944
        %vm953 = vmand %vm905, %vm945
        %vm954 = vmand %vm906, %vm946
        %v955 = vsel %vm947, %v267, 0.0
        %v956 = vsel %vm948, %v268, 0.0
        %v957 = vsel %vm949, %v269, 0.0
        %v958 = vsel %vm950, %v270, 0.0
        %v959 = vsel %vm951, %v271, 0.0
        %v960 = vsel %vm952, %v272, 0.0
        %v961 = vsel %vm953, %v273, 0.0
        %v962 = vsel %vm954, %v274, 0.0
        %963 = vadd.xlane.f32.xlu0 %v955
        %v964 = vpop.xlane.xlu0 %963
        %965 = vadd.xlane.f32.xlu0 %v956
        %v966 = vpop.xlane.xlu0 %965
        %967 = vadd.xlane.f32.xlu0 %v957
        %v968 = vpop.xlane.xlu0 %967
        %969 = vadd.xlane.f32.xlu0 %v958
        %v970 = vpop.xlane.xlu0 %969
        %971 = vadd.xlane.f32.xlu0 %v959
        %v972 = vpop.xlane.xlu0 %971
        %973 = vadd.xlane.f32.xlu0 %v960
        %v974 = vpop.xlane.xlu0 %973
        %975 = vadd.xlane.f32.xlu0 %v961
        %v976 = vpop.xlane.xlu0 %975
        %977 = vadd.xlane.f32.xlu0 %v962
        %v978 = vpop.xlane.xlu0 %977
        %v979 = vadd.f32 %v964, %v465
        %v980 = vadd.f32 %v966, %v465
        %v981 = vadd.f32 %v968, %v465
        %v982 = vadd.f32 %v970, %v465
        %v983 = vadd.f32 %v972, %v465
        %v984 = vadd.f32 %v974, %v465
        %v985 = vadd.f32 %v976, %v465
        %v986 = vadd.f32 %v978, %v465
        %v987 = vsel %vm947, %v311, 0.0
        %v988 = vsel %vm948, %v312, 0.0
        %v989 = vsel %vm949, %v313, 0.0
        %v990 = vsel %vm950, %v314, 0.0
        %v991 = vsel %vm951, %v315, 0.0
        %v992 = vsel %vm952, %v316, 0.0
        %v993 = vsel %vm953, %v317, 0.0
        %v994 = vsel %vm954, %v318, 0.0
        %995 = vadd.xlane.f32.xlu0 %v987
        %v996 = vpop.xlane.xlu0 %995
        %997 = vadd.xlane.f32.xlu0 %v988
        %v998 = vpop.xlane.xlu0 %997
        %999 = vadd.xlane.f32.xlu0 %v989
        %v1000 = vpop.xlane.xlu0 %999
        %1001 = vadd.xlane.f32.xlu0 %v990
        %v1002 = vpop.xlane.xlu0 %1001
        %1003 = vadd.xlane.f32.xlu0 %v991
        %v1004 = vpop.xlane.xlu0 %1003
        %1005 = vadd.xlane.f32.xlu0 %v992
        %v1006 = vpop.xlane.xlu0 %1005
        %1007 = vadd.xlane.f32.xlu0 %v993
        %v1008 = vpop.xlane.xlu0 %1007
        %1009 = vadd.xlane.f32.xlu0 %v994
        %v1010 = vpop.xlane.xlu0 %1009
        %v1011 = vadd.f32 %v996, %v465
        %v1012 = vadd.f32 %v998, %v465
        %v1013 = vadd.f32 %v1000, %v465
        %v1014 = vadd.f32 %v1002, %v465
        %v1015 = vadd.f32 %v1004, %v465
        %v1016 = vadd.f32 %v1006, %v465
        %v1017 = vadd.f32 %v1008, %v465
        %v1018 = vadd.f32 %v1010, %v465
        %vm1019 = vcmp.eq.s32.totalorder %v220, 3
        %v1020 = vsel %vm1019, 1, 0
        %vm1021 = vcmp.eq.s32.totalorder %v1020, 1
        %v1022 = vsel %vm1021, %v979, %v859
        %v1023 = vsel %vm1021, %v980, %v860
        %v1024 = vsel %vm1021, %v981, %v861
        %v1025 = vsel %vm1021, %v982, %v862
        %v1026 = vsel %vm1021, %v983, %v863
        %v1027 = vsel %vm1021, %v984, %v864
        %v1028 = vsel %vm1021, %v985, %v865
        %v1029 = vsel %vm1021, %v986, %v866
        %v1030 = vsel %vm1021, %v1011, %v867
        %v1031 = vsel %vm1021, %v1012, %v868
        %v1032 = vsel %vm1021, %v1013, %v869
        %v1033 = vsel %vm1021, %v1014, %v870
        %v1034 = vsel %vm1021, %v1015, %v871
        %v1035 = vsel %vm1021, %v1016, %v872
        %v1036 = vsel %vm1021, %v1017, %v873
        %v1037 = vsel %vm1021, %v1018, %v874
        %1038 = vst [vmem:[%s168] sm:$0xff] %v1022
        %1039 = vst [vmem:[%s168 + $0x8] sm:$0xff] %v1023
        %1040 = vst [vmem:[%s168 + $0x10] sm:$0xff] %v1024
        %1041 = vst [vmem:[%s168 + $0x18] sm:$0xff] %v1025
        %1042 = vst [vmem:[%s168 + $0x20] sm:$0xff] %v1026
        %1043 = vst [vmem:[%s168 + $0x28] sm:$0xff] %v1027
        %1044 = vst [vmem:[%s168 + $0x30] sm:$0xff] %v1028
        %1045 = vst [vmem:[%s168 + $0x38] sm:$0xff] %v1029
        %1046 = vst [vmem:[%s175] sm:$0xff] %v1030
        %1047 = vst [vmem:[%s175 + $0x8] sm:$0xff] %v1031
        %1048 = vst [vmem:[%s175 + $0x10] sm:$0xff] %v1032
        %1049 = vst [vmem:[%s175 + $0x18] sm:$0xff] %v1033
        %1050 = vst [vmem:[%s175 + $0x20] sm:$0xff] %v1034
        %1051 = vst [vmem:[%s175 + $0x28] sm:$0xff] %v1035
        %1052 = vst [vmem:[%s175 + $0x30] sm:$0xff] %v1036
        %1053 = vst [vmem:[%s175 + $0x38] sm:$0xff] %v1037
        %s1054 = sand.u32 %s76, 1
        %s1055 = scalar_lea.sflag [#allocation3], %s1054
        %s1056 = sand.u32 %s76, 1
        %s1057 = smul.addr %s1056, 64
        %s1058 = scalar_lea.vmem [#allocation2], %s1057
        %s1059 = sand.u32 %s102, 1
        %s1060 = scalar_lea.sflag [#allocation5], %s1059
        %s1061 = sand.u32 %s102, 1
        %s1062 = smul.addr %s1061, 64
        %s1063 = scalar_lea.vmem [#allocation4], %s1062
        // Predicated region
        $region29: #{tpu_custom_call.1} parent=27 // pred_check
          %p1064 = pneg %p86
        $region30: #{tpu_custom_call.1} parent=27 // pred_check_branch
          %1066 = sbr.rel (%p1064) target = $region32
        $region31: #{tpu_custom_call.1} parent=27 // pred_region
          %s1067 = smul.u32 8, %s21
          %s1069 = ssub.s32 1024, 1024
          %1070 = vsyncadd %s1055, %s1069
          %s1071 = smul.addr %s1067, 128
          %s1072 = scalar_lea.hbm %s2, %s1071
          %s1073 = sshll.u32 %s1058, 4
          %s1074 = int_to_ptr.vmem [resolvable:$true] %s1073
          %1079 = dma.vmem_to_hbm [thread:$0]  %s1074, 1024, %s1072, %s1055, 128, 128, 8
        $region32: #{tpu_custom_call.1} parent=27 // pred_fallthru
          _
        // Predicated region
        $region33: #{tpu_custom_call.1} parent=27 // pred_check
          %p1080 = pneg %p112
        $region34: #{tpu_custom_call.1} parent=27 // pred_check_branch
          %1082 = sbr.rel (%p1080) target = $region36
        $region35: #{tpu_custom_call.1} parent=27 // pred_region
          %s1083 = smul.u32 8, %s21
          %s1085 = ssub.s32 1024, 1024
          %1086 = vsyncadd %s1060, %s1085
          %s1087 = smul.addr %s1083, 128
          %s1088 = scalar_lea.hbm %s3, %s1087
          %s1089 = sshll.u32 %s1063, 4
          %s1090 = int_to_ptr.vmem [resolvable:$true] %s1089
          %1095 = dma.vmem_to_hbm [thread:$0]  %s1090, 1024, %s1088, %s1060, 128, 128, 8
        $region36: #{tpu_custom_call.1} parent=27 // pred_fallthru
          _
      $region28: #{tpu_custom_call.1} parent=5 // pred_fallthru
        _
      %p1096 = scmp.le.s32.totalorder 2, %s16
      // Predicated region
      $region37: #{tpu_custom_call.1} parent=5 // pred_check
        %p1097 = pneg %p1096
      $region38: #{tpu_custom_call.1} parent=5 // pred_check_branch
        %1099 = sbr.rel (%p1097) target = $region40
      $region39: #{tpu_custom_call.1} parent=5 // pred_region
        %s1100 = ssub.s32 %s16, 2
        // Predicated region
        $region41: #{tpu_custom_call.1} parent=39 // pred_check
          %p1101 = pneg %p92
        $region42: #{tpu_custom_call.1} parent=39 // pred_check_branch
          %1103 = sbr.rel (%p1101) target = $region44
        $region43: #{tpu_custom_call.1} parent=39 // pred_region
          %s1104 = sand.u32 %s77, 1
          %s1105 = scalar_lea.sflag [#allocation3], %s1104
          %s1106 = sand.u32 %s77, 1
          %s1107 = smul.addr %s1106, 64
          %s1108 = scalar_lea.vmem [#allocation2], %s1107
          %1109 = dma.done %s1105, 1024
        $region44: #{tpu_custom_call.1} parent=39 // pred_fallthru
          _
        // Predicated region
        $region45: #{tpu_custom_call.1} parent=39 // pred_check
          %p1110 = pneg %p118
        $region46: #{tpu_custom_call.1} parent=39 // pred_check_branch
          %1112 = sbr.rel (%p1110) target = $region48
        $region47: #{tpu_custom_call.1} parent=39 // pred_region
          %s1113 = sand.u32 %s103, 1
          %s1114 = scalar_lea.sflag [#allocation5], %s1113
          %s1115 = sand.u32 %s103, 1
          %s1116 = smul.addr %s1115, 64
          %s1117 = scalar_lea.vmem [#allocation4], %s1116
          %1118 = dma.done %s1114, 1024
        $region48: #{tpu_custom_call.1} parent=39 // pred_fallthru
          _
      $region40: #{tpu_custom_call.1} parent=5 // pred_fallthru
        _
    $region6: #{tpu_custom_call.1} parent=1 // loop_footer
      %s20 = sadd.s32 1, %s16
    $region7: #{tpu_custom_call.1} parent=1 // loop_footer_branch
      %15 = sbr.rel target = $region3
    $region8: #{tpu_custom_call.1} parent=1 // loop_exit
      _
    %1119 = vsyncpa [#allocation3], 1
    %s1120 = scalar_lea.sflag [#allocation3], 1
    %1121 = vsyncpa %s1120, 1
    %1122 = vsyncpa [#allocation5], 1
    %s1123 = scalar_lea.sflag [#allocation5], 1
    %1124 = vsyncpa %s1123, 1

</llo_original>
